<compile_context>
chip_gen: v7x
topology: tpu7x:2x2x1
jax: 0.10.0
libtpu: 0.0.40
codegen_flags: <defaults>
</compile_context>

<pallas_src>
import functools

import jax
import jax.numpy as jnp
import numpy as np
from jax.experimental import pallas as pl
from jax.experimental.pallas import tpu as pltpu


def _round_up(x, m):
    return (x + m - 1) // m * m


# ---------------------------------------------------------------------------
# Pallas kernel: one (row-tile, k-tile) step of relu((A_hat @ H) @ W + b)
# ---------------------------------------------------------------------------
def _gcn_layer_kernel(adj_ref, h_ref, w_ref, b_ref, o_ref, acc_ref, *,
                      tile_k, h_resident):
    k = pl.program_id(1)

    @pl.when(k == 0)
    def _init():
        acc_ref[...] = jnp.zeros_like(acc_ref)

    if h_resident:
        # H is fully resident in VMEM: slice the current k-chunk in-kernel.
        start = pl.multiple_of(k * tile_k, tile_k)
        h_blk = h_ref[pl.ds(start, tile_k), :]
    else:
        h_blk = h_ref[...]

    # bf16 x bf16 -> f32 accumulation on the MXU.
    acc_ref[...] += jnp.dot(adj_ref[...], h_blk,
                            preferred_element_type=jnp.float32)

    @pl.when(k == pl.num_programs(1) - 1)
    def _finalize():
        # Fused feature transform: (A@H) @ W_gc + b, then ReLU, bf16 writeback.
        z = jnp.dot(acc_ref[...].astype(jnp.bfloat16), w_ref[...],
                    preferred_element_type=jnp.float32) + b_ref[...]
        o_ref[...] = jnp.maximum(z, 0.0).astype(o_ref.dtype)


def _make_gcn_layer(n_pad, h_pad, tile_m, tile_k):
    """Builds the tiled pallas_call for one fused GCNConv layer."""
    grid = (n_pad // tile_m, n_pad // tile_k)

    # Keep H fully resident in VMEM when it comfortably fits (budgeting a
    # worst-case double buffer); otherwise stream it per reduction tile.
    h_bytes_resident = 2 * n_pad * h_pad * 2
    h_resident = h_bytes_resident <= 16 * 1024 * 1024
    if h_resident:
        h_spec = pl.BlockSpec((n_pad, h_pad), lambda i, k: (0, 0))
        h_buf = h_bytes_resident
    else:
        h_spec = pl.BlockSpec((tile_k, h_pad), lambda i, k: (k, 0))
        h_buf = 2 * tile_k * h_pad * 2

    # VMEM budget: double-buffered adj/out tiles, H, resident W/bias, f32 acc.
    need = (2 * tile_m * tile_k * 2      # adjacency tile (bf16), 2 buffers
            + h_buf                       # H (bf16)
            + 2 * h_pad * h_pad * 2       # W_gc (bf16)
            + 2 * h_pad * 4               # bias (f32)
            + 2 * tile_m * h_pad * 2      # out tile (bf16), 2 buffers
            + tile_m * h_pad * 4)         # f32 accumulator
    # Cap at 48 MiB so the same configuration is safe on v7x's 64 MiB VMEM.
    vmem_limit = int(min(max(2 * need, 32 * 1024 * 1024), 48 * 1024 * 1024))

    kernel = functools.partial(_gcn_layer_kernel, tile_k=tile_k,
                               h_resident=h_resident)
    return pl.pallas_call(
        kernel,
        grid_spec=pltpu.PrefetchScalarGridSpec(
            num_scalar_prefetch=0,
            grid=grid,
            in_specs=[
                pl.BlockSpec((tile_m, tile_k), lambda i, k: (i, k)),  # A_hat bf16
                h_spec,                                               # H     bf16
                pl.BlockSpec((h_pad, h_pad), lambda i, k: (0, 0)),    # W_gc  bf16
                pl.BlockSpec((1, h_pad), lambda i, k: (0, 0)),        # bias  f32
            ],
            out_specs=pl.BlockSpec((tile_m, h_pad), lambda i, k: (i, 0)),
            scratch_shapes=[pltpu.VMEM((tile_m, h_pad), jnp.float32)],
        ),
        out_shape=jax.ShapeDtypeStruct((n_pad, h_pad), jnp.bfloat16),
        compiler_params=pltpu.CompilerParams(
            dimension_semantics=("parallel", "arbitrary"),
            vmem_limit_bytes=vmem_limit,
        ),
    )


# ---------------------------------------------------------------------------
# Tiling / adjacency preparation (hoisted out of the per-call forward)
# ---------------------------------------------------------------------------
def choose_tiles(n):
    """Pad N to a 256 base (not to tile_m) and pick tiles dividing n_pad."""
    n_pad = _round_up(max(n, 256), 256)
    tile_m = next(t for t in (2048, 1024, 512, 256) if n_pad % t == 0)
    tile_k = next(t for t in (512, 256) if n_pad % t == 0)
    return n_pad, tile_m, tile_k


def pad_adjacency(a_hat, n_pad):
    """Pad + cast A_hat to bf16 once (hoisted out of resgcn_forward).

    Padded rows/columns are explicitly zero: padded node rows of H may carry
    relu(bias) garbage between layers, but the zero COLUMNS guarantee it never
    leaks into valid rows. Keep this invariant if the padding scheme changes.
    """
    n = a_hat.shape[0]
    adj = jnp.zeros((n_pad, n_pad), jnp.bfloat16)
    return adj.at[:n, :n].set(a_hat.astype(jnp.bfloat16))


# ---------------------------------------------------------------------------
# Full ResGCN forward
# ---------------------------------------------------------------------------
@functools.partial(jax.jit, static_argnames=("num_layers", "tile_m", "tile_k"))
def resgcn_forward(x, adj_pad, params, *, num_layers, tile_m, tile_k):
    n, _ = x.shape
    n_pad = adj_pad.shape[0]
    hidden = params["w_in"].shape[1]
    h_pad = _round_up(hidden, 128)          # lane-dense hidden dimension

    # Zero-pad GCN weights / biases to the 128-lane hidden size. Weights in
    # bf16: the fused finalize matmul runs bf16 x bf16 -> f32 on the MXU.
    w_gc = jnp.zeros((num_layers, h_pad, h_pad), jnp.bfloat16)
    w_gc = w_gc.at[:, :hidden, :hidden].set(params["w_gc"].astype(jnp.bfloat16))
    b_gc = jnp.zeros((num_layers, 1, h_pad), jnp.float32)
    b_gc = b_gc.at[:, :, :hidden].set(params["b_gc"])

    # Input linear (tiny — plain XLA) and residual.
    h0 = x @ params["w_in"] + params["b_in"]                   # (n, hidden) f32
    res = h0
    h = jnp.zeros((n_pad, h_pad), jnp.bfloat16)
    h = h.at[:n, :hidden].set(h0.astype(jnp.bfloat16))

    gcn_layer = _make_gcn_layer(n_pad, h_pad, tile_m, tile_k)
    for l in range(num_layers):                                 # small, static
        # Fused: relu( (A_hat @ H) @ W_gc[l] + b_gc[l] ), bf16 output feeds
        # the next layer directly (no intermediate f32 round trip).
        h = gcn_layer(adj_pad, h, w_gc[l], b_gc[l])             # (n_pad, h_pad)

    h = h[:n, :hidden].astype(jnp.float32) + res                # residual 'add'
    return h @ params["w_out"] + params["b_out"]                # output linear


# ---------------------------------------------------------------------------
# Glue + reference (plain JAX)
# ---------------------------------------------------------------------------
def build_normalized_adj(edge_index, edge_weight, num_nodes):
    """Dense GCN-normalized adjacency (glue, plain JAX)."""
    row, col = edge_index[0], edge_index[1]          # source, target
    loop = jnp.arange(num_nodes, dtype=row.dtype)
    row = jnp.concatenate([row, loop])
    col = jnp.concatenate([col, loop])
    ew = jnp.concatenate(
        [edge_weight.astype(jnp.float32), jnp.ones((num_nodes,), jnp.float32)])
    # A[t, s] accumulates edge weights (matches scatter-add of sparse edges)
    a = jnp.zeros((num_nodes, num_nodes), jnp.float32).at[col, row].add(ew)
    deg = jnp.sum(a, axis=1)
    dinv = jnp.where(deg > 0, 1.0 / jnp.sqrt(deg), 0.0)
    return dinv[:, None] * a * dinv[None, :]


def resgcn_reference(x, a_hat, params, *, num_layers):
    """Pure-JAX reference, precision-matched to the fused kernel:
    relu( bf16( A_bf16 @ H_bf16 ->f32 ) @ W_bf16 ->f32 + b ), bf16 layer out."""
    a = a_hat.astype(jnp.bfloat16)
    h0 = x @ params["w_in"] + params["b_in"]
    res = h0
    h = h0.astype(jnp.bfloat16)
    for l in range(num_layers):
        agg = jnp.dot(a, h, preferred_element_type=jnp.float32)
        z = jnp.dot(agg.astype(jnp.bfloat16),
                    params["w_gc"][l].astype(jnp.bfloat16),
                    preferred_element_type=jnp.float32) + params["b_gc"][l]
        h = jnp.maximum(z, 0.0).astype(jnp.bfloat16)
    h = h.astype(jnp.float32) + res
    return h @ params["w_out"] + params["b_out"]


if __name__ == "__main__":
    # Shapes consistent with ResGCN.init_model: features_num=8,
    # hidden = 2**5 = 32, num_layers=2, n_class=4; N=600 nodes, 2400 edges.
    # n_pad=768 with 256x256 tiles -> (3, 3) grid, exercising the tiled f32
    # accumulator, resident-H slicing, and fused finalize.
    N, F, H, C, L, E = 600, 8, 32, 4, 2, 2400

    key = jax.random.PRNGKey(0)
    ks = jax.random.split(key, 10)

    x = jax.random.normal(ks[0], (N, F), dtype=jnp.float32)
    edge_src = jax.random.randint(ks[1], (E,), 0, N, dtype=jnp.int32)
    edge_dst = jax.random.randint(ks[2], (E,), 0, N, dtype=jnp.int32)
    edge_index = jnp.stack([edge_src, edge_dst], axis=0)          # (2, E)
    edge_weight = jax.random.uniform(ks[3], (E,), jnp.float32, 0.5, 1.5)

    # Weights stored as (in, out); nn.Linear / GCNConv apply x @ W^T,
    # equivalent to x @ W_here.
    params = {
        "w_in":  jax.random.normal(ks[4], (F, H), jnp.float32) * 0.1,
        "b_in":  jax.random.normal(ks[5], (1, H), jnp.float32) * 0.1,
        "w_gc":  jax.random.normal(ks[6], (L, H, H), jnp.float32) * 0.1,
        "b_gc":  jax.random.normal(ks[7], (L, 1, H), jnp.float32) * 0.1,
        "w_out": jax.random.normal(ks[8], (H, C), jnp.float32) * 0.1,
        "b_out": jax.random.normal(ks[9], (1, C), jnp.float32) * 0.1,
    }

    a_hat = build_normalized_adj(edge_index, edge_weight, N)

    # Adjacency pad/cast done once, outside the jitted forward.
    n_pad, tile_m, tile_k = choose_tiles(N)
    adj_pad = jax.block_until_ready(pad_adjacency(a_hat, n_pad))

    out = resgcn_forward(x, adj_pad, params, num_layers=L,
                         tile_m=tile_m, tile_k=tile_k)
    out = jax.block_until_ready(out)

    ref = jax.block_until_ready(resgcn_reference(x, a_hat, params, num_layers=L))
    assert out.shape == (N, C), out.shape
    np.testing.assert_allclose(np.asarray(out), np.asarray(ref),
                               rtol=2e-2, atol=2e-2)

    print("KERNEL_OK")
</pallas_src>

<mosaic_0001>
module attributes {stable_mosaic.version = 11 : i64} {
  func.func @_gcn_layer_kernel(%arg0: i32, %arg1: i32, %arg2: memref<256x256xbf16, #tpu.memory_space<vmem>>, %arg3: memref<768x128xbf16, #tpu.memory_space<vmem>>, %arg4: memref<128x128xbf16, #tpu.memory_space<vmem>>, %arg5: memref<1x128xf32, #tpu.memory_space<vmem>>, %arg6: memref<256x128xbf16, #tpu.memory_space<vmem>>, %arg7: memref<256x128xf32, #tpu.memory_space<vmem>>) attributes {dimension_semantics = [#tpu.dimension_semantics<parallel>, #tpu.dimension_semantics<arbitrary>], iteration_bounds = array<i64: 3, 3>, scalar_prefetch = 0 : i64, scratch_operands = 1 : i64, tpu.core_type = #tpu.core_type<tc>, window_params = [{transform_indices = @transform_0, window_bounds = array<i64: 256, 256>}, {pipeline_mode = #tpu.pipeline_mode<synchronous>, transform_indices = @transform_1, window_bounds = array<i64: 768, 128>}, {pipeline_mode = #tpu.pipeline_mode<synchronous>, transform_indices = @transform_2, window_bounds = array<i64: 128, 128>}, {pipeline_mode = #tpu.pipeline_mode<synchronous>, transform_indices = @transform_3, window_bounds = array<i64: 1, 128>}, {transform_indices = @transform_4, window_bounds = array<i64: 256, 128>}]} {
    %c0_i32 = arith.constant 0 : i32
    %0 = arith.cmpi eq, %arg1, %c0_i32 : i32
    %1 = arith.extui %0 : i1 to i32
    %c0_i32_0 = arith.constant 0 : i32
    %2 = arith.cmpi ne, %1, %c0_i32_0 : i32
    scf.if %2 {
      %cst_8 = arith.constant 0.000000e+00 : f32
      %15 = vector.broadcast %cst_8 : f32 to vector<256x128xf32>
      %c0_9 = arith.constant 0 : index
      %c0_10 = arith.constant 0 : index
      %16 = vector.load %arg7[%c0_9, %c0_10] : memref<256x128xf32, #tpu.memory_space<vmem>>, vector<256x128xf32>
      tpu.vector_store %arg7[%c0_9, %c0_10], %15 {strides = array<i32>} : memref<256x128xf32, #tpu.memory_space<vmem>>, vector<256x128xf32>,
    } else {
    }
    %c256_i32 = arith.constant 256 : i32
    %3 = arith.muli %arg1, %c256_i32 : i32
    %4 = tpu.assume_multiple %3, 256 : i32
    %5 = arith.index_cast %4 : i32 to index
    %c0 = arith.constant 0 : index
    %6 = vector.load %arg3[%5, %c0] : memref<768x128xbf16, #tpu.memory_space<vmem>>, vector<256x128xbf16>
    %c0_1 = arith.constant 0 : index
    %c0_2 = arith.constant 0 : index
    %7 = vector.load %arg7[%c0_1, %c0_2] : memref<256x128xf32, #tpu.memory_space<vmem>>, vector<256x128xf32>
    %c0_3 = arith.constant 0 : index
    %c0_4 = arith.constant 0 : index
    %8 = vector.load %arg2[%c0_3, %c0_4] : memref<256x256xbf16, #tpu.memory_space<vmem>>, vector<256x256xbf16>
    %cst = arith.constant dense<0.000000e+00> : vector<256x128xf32>
    %9 = tpu.matmul %8, %6, %cst {dimension_numbers = #tpu.dot_dimension_numbers<[1], [0], [0], [1], [0, 0, 1, 1], [], []>} : vector<256x256xbf16>, vector<256x128xbf16>, vector<256x128xf32> -> vector<256x128xf32>
    %10 = arith.addf %7, %9 : vector<256x128xf32>
    %c0_5 = arith.constant 0 : index
    %c0_6 = arith.constant 0 : index
    %11 = vector.load %arg7[%c0_5, %c0_6] : memref<256x128xf32, #tpu.memory_space<vmem>>, vector<256x128xf32>
    tpu.vector_store %arg7[%c0_5, %c0_6], %10 {strides = array<i32>} : memref<256x128xf32, #tpu.memory_space<vmem>>, vector<256x128xf32>,
    %c2_i32 = arith.constant 2 : i32
    %12 = arith.cmpi eq, %arg1, %c2_i32 : i32
    %13 = arith.extui %12 : i1 to i32
    %c0_i32_7 = arith.constant 0 : i32
    %14 = arith.cmpi ne, %13, %c0_i32_7 : i32
    scf.if %14 {
      %c0_8 = arith.constant 0 : index
      %c0_9 = arith.constant 0 : index
      %15 = vector.load %arg7[%c0_8, %c0_9] : memref<256x128xf32, #tpu.memory_space<vmem>>, vector<256x128xf32>
      %16 = arith.truncf %15 : vector<256x128xf32> to vector<256x128xbf16>
      %c0_10 = arith.constant 0 : index
      %c0_11 = arith.constant 0 : index
      %17 = vector.load %arg4[%c0_10, %c0_11] : memref<128x128xbf16, #tpu.memory_space<vmem>>, vector<128x128xbf16>
      %cst_12 = arith.constant dense<0.000000e+00> : vector<256x128xf32>
      %18 = tpu.matmul %16, %17, %cst_12 {dimension_numbers = #tpu.dot_dimension_numbers<[1], [0], [0], [1], [0, 0, 1, 1], [], []>} : vector<256x128xbf16>, vector<128x128xbf16>, vector<256x128xf32> -> vector<256x128xf32>
      %c0_13 = arith.constant 0 : index
      %c0_14 = arith.constant 0 : index
      %19 = vector.load %arg5[%c0_13, %c0_14] : memref<1x128xf32, #tpu.memory_space<vmem>>, vector<1x128xf32>
      %20 = vector.broadcast %19 : vector<1x128xf32> to vector<256x128xf32>
      %21 = arith.addf %18, %20 : vector<256x128xf32>
      %cst_15 = arith.constant 0.000000e+00 : f32
      %22 = vector.broadcast %cst_15 : f32 to vector<256x128xf32>
      %23 = arith.maximumf %21, %22 : vector<256x128xf32>
      %24 = arith.truncf %23 : vector<256x128xf32> to vector<256x128xbf16>
      %c0_16 = arith.constant 0 : index
      %c0_17 = arith.constant 0 : index
      %25 = vector.load %arg6[%c0_16, %c0_17] : memref<256x128xbf16, #tpu.memory_space<vmem>>, vector<256x128xbf16>
      tpu.vector_store %arg6[%c0_16, %c0_17], %24 {strides = array<i32>} : memref<256x128xbf16, #tpu.memory_space<vmem>>, vector<256x128xbf16>,
    } else {
    }
    return
  }
  func.func @transform_0(%arg0: i32, %arg1: i32) -> (i32, i32) {
    %c0_i32 = arith.constant 0 : i32
    return %arg0, %arg1 : i32, i32
  }
  func.func @transform_1(%arg0: i32, %arg1: i32) -> (i32, i32) {
    %c0_i32 = arith.constant 0 : i32
    %c0_i32_0 = arith.constant 0 : i32
    %c0_i32_1 = arith.constant 0 : i32
    return %c0_i32, %c0_i32_0 : i32, i32
  }
  func.func @transform_2(%arg0: i32, %arg1: i32) -> (i32, i32) {
    %c0_i32 = arith.constant 0 : i32
    %c0_i32_0 = arith.constant 0 : i32
    %c0_i32_1 = arith.constant 0 : i32
    return %c0_i32, %c0_i32_0 : i32, i32
  }
  func.func @transform_3(%arg0: i32, %arg1: i32) -> (i32, i32) {
    %c0_i32 = arith.constant 0 : i32
    %c0_i32_0 = arith.constant 0 : i32
    %c0_i32_1 = arith.constant 0 : i32
    return %c0_i32, %c0_i32_0 : i32, i32
  }
  func.func @transform_4(%arg0: i32, %arg1: i32) -> (i32, i32) {
    %c0_i32 = arith.constant 0 : i32
    %c0_i32_0 = arith.constant 0 : i32
    return %arg0, %c0_i32 : i32, i32
  }
}

module attributes {stable_mosaic.version = 11 : i64} {
  func.func @_gcn_layer_kernel(%arg0: i32, %arg1: i32, %arg2: memref<256x256xbf16, #tpu.memory_space<vmem>>, %arg3: memref<768x128xbf16, #tpu.memory_space<vmem>>, %arg4: memref<128x128xbf16, #tpu.memory_space<vmem>>, %arg5: memref<1x128xf32, #tpu.memory_space<vmem>>, %arg6: memref<256x128xbf16, #tpu.memory_space<vmem>>, %arg7: memref<256x128xf32, #tpu.memory_space<vmem>>) attributes {dimension_semantics = [#tpu.dimension_semantics<parallel>, #tpu.dimension_semantics<arbitrary>], iteration_bounds = array<i64: 3, 3>, scalar_prefetch = 0 : i64, scratch_operands = 1 : i64, tpu.core_type = #tpu.core_type<tc>, window_params = [{transform_indices = @transform_0, window_bounds = array<i64: 256, 256>}, {pipeline_mode = #tpu.pipeline_mode<synchronous>, transform_indices = @transform_1, window_bounds = array<i64: 768, 128>}, {pipeline_mode = #tpu.pipeline_mode<synchronous>, transform_indices = @transform_2, window_bounds = array<i64: 128, 128>}, {pipeline_mode = #tpu.pipeline_mode<synchronous>, transform_indices = @transform_3, window_bounds = array<i64: 1, 128>}, {transform_indices = @transform_4, window_bounds = array<i64: 256, 128>}]} {
    %c0_i32 = arith.constant 0 : i32
    %0 = arith.cmpi eq, %arg1, %c0_i32 : i32
    %1 = arith.extui %0 : i1 to i32
    %c0_i32_0 = arith.constant 0 : i32
    %2 = arith.cmpi ne, %1, %c0_i32_0 : i32
    scf.if %2 {
      %cst_8 = arith.constant 0.000000e+00 : f32
      %15 = vector.broadcast %cst_8 : f32 to vector<256x128xf32>
      %c0_9 = arith.constant 0 : index
      %c0_10 = arith.constant 0 : index
      %16 = vector.load %arg7[%c0_9, %c0_10] : memref<256x128xf32, #tpu.memory_space<vmem>>, vector<256x128xf32>
      tpu.vector_store %arg7[%c0_9, %c0_10], %15 {strides = array<i32>} : memref<256x128xf32, #tpu.memory_space<vmem>>, vector<256x128xf32>,
    } else {
    }
    %c256_i32 = arith.constant 256 : i32
    %3 = arith.muli %arg1, %c256_i32 : i32
    %4 = tpu.assume_multiple %3, 256 : i32
    %5 = arith.index_cast %4 : i32 to index
    %c0 = arith.constant 0 : index
    %6 = vector.load %arg3[%5, %c0] : memref<768x128xbf16, #tpu.memory_space<vmem>>, vector<256x128xbf16>
    %c0_1 = arith.constant 0 : index
    %c0_2 = arith.constant 0 : index
    %7 = vector.load %arg7[%c0_1, %c0_2] : memref<256x128xf32, #tpu.memory_space<vmem>>, vector<256x128xf32>
    %c0_3 = arith.constant 0 : index
    %c0_4 = arith.constant 0 : index
    %8 = vector.load %arg2[%c0_3, %c0_4] : memref<256x256xbf16, #tpu.memory_space<vmem>>, vector<256x256xbf16>
    %cst = arith.constant dense<0.000000e+00> : vector<256x128xf32>
    %9 = tpu.matmul %8, %6, %cst {dimension_numbers = #tpu.dot_dimension_numbers<[1], [0], [0], [1], [0, 0, 1, 1], [], []>} : vector<256x256xbf16>, vector<256x128xbf16>, vector<256x128xf32> -> vector<256x128xf32>
    %10 = arith.addf %7, %9 : vector<256x128xf32>
    %c0_5 = arith.constant 0 : index
    %c0_6 = arith.constant 0 : index
    %11 = vector.load %arg7[%c0_5, %c0_6] : memref<256x128xf32, #tpu.memory_space<vmem>>, vector<256x128xf32>
    tpu.vector_store %arg7[%c0_5, %c0_6], %10 {strides = array<i32>} : memref<256x128xf32, #tpu.memory_space<vmem>>, vector<256x128xf32>,
    %c2_i32 = arith.constant 2 : i32
    %12 = arith.cmpi eq, %arg1, %c2_i32 : i32
    %13 = arith.extui %12 : i1 to i32
    %c0_i32_7 = arith.constant 0 : i32
    %14 = arith.cmpi ne, %13, %c0_i32_7 : i32
    scf.if %14 {
      %c0_8 = arith.constant 0 : index
      %c0_9 = arith.constant 0 : index
      %15 = vector.load %arg7[%c0_8, %c0_9] : memref<256x128xf32, #tpu.memory_space<vmem>>, vector<256x128xf32>
      %16 = arith.truncf %15 : vector<256x128xf32> to vector<256x128xbf16>
      %c0_10 = arith.constant 0 : index
      %c0_11 = arith.constant 0 : index
      %17 = vector.load %arg4[%c0_10, %c0_11] : memref<128x128xbf16, #tpu.memory_space<vmem>>, vector<128x128xbf16>
      %cst_12 = arith.constant dense<0.000000e+00> : vector<256x128xf32>
      %18 = tpu.matmul %16, %17, %cst_12 {dimension_numbers = #tpu.dot_dimension_numbers<[1], [0], [0], [1], [0, 0, 1, 1], [], []>} : vector<256x128xbf16>, vector<128x128xbf16>, vector<256x128xf32> -> vector<256x128xf32>
      %c0_13 = arith.constant 0 : index
      %c0_14 = arith.constant 0 : index
      %19 = vector.load %arg5[%c0_13, %c0_14] : memref<1x128xf32, #tpu.memory_space<vmem>>, vector<1x128xf32>
      %20 = vector.broadcast %19 : vector<1x128xf32> to vector<256x128xf32>
      %21 = arith.addf %18, %20 : vector<256x128xf32>
      %cst_15 = arith.constant 0.000000e+00 : f32
      %22 = vector.broadcast %cst_15 : f32 to vector<256x128xf32>
      %23 = arith.maximumf %21, %22 : vector<256x128xf32>
      %24 = arith.truncf %23 : vector<256x128xf32> to vector<256x128xbf16>
      %c0_16 = arith.constant 0 : index
      %c0_17 = arith.constant 0 : index
      %25 = vector.load %arg6[%c0_16, %c0_17] : memref<256x128xbf16, #tpu.memory_space<vmem>>, vector<256x128xbf16>
      tpu.vector_store %arg6[%c0_16, %c0_17], %24 {strides = array<i32>} : memref<256x128xbf16, #tpu.memory_space<vmem>>, vector<256x128xbf16>,
    } else {
    }
    return
  }
  func.func @transform_0(%arg0: i32, %arg1: i32) -> (i32, i32) {
    %c0_i32 = arith.constant 0 : i32
    return %arg0, %arg1 : i32, i32
  }
  func.func @transform_1(%arg0: i32, %arg1: i32) -> (i32, i32) {
    %c0_i32 = arith.constant 0 : i32
    %c0_i32_0 = arith.constant 0 : i32
    %c0_i32_1 = arith.constant 0 : i32
    return %c0_i32, %c0_i32_0 : i32, i32
  }
  func.func @transform_2(%arg0: i32, %arg1: i32) -> (i32, i32) {
    %c0_i32 = arith.constant 0 : i32
    %c0_i32_0 = arith.constant 0 : i32
    %c0_i32_1 = arith.constant 0 : i32
    return %c0_i32, %c0_i32_0 : i32, i32
  }
  func.func @transform_3(%arg0: i32, %arg1: i32) -> (i32, i32) {
    %c0_i32 = arith.constant 0 : i32
    %c0_i32_0 = arith.constant 0 : i32
    %c0_i32_1 = arith.constant 0 : i32
    return %c0_i32, %c0_i32_0 : i32, i32
  }
  func.func @transform_4(%arg0: i32, %arg1: i32) -> (i32, i32) {
    %c0_i32 = arith.constant 0 : i32
    %c0_i32_0 = arith.constant 0 : i32
    return %arg0, %c0_i32 : i32, i32
  }
}

</mosaic_0001>

<llo_original>
// kernel: resgcn_forward.3
$region0: #{resgcn_forward.3}
  #allocation0 [shape = 'u32[]', space=smem, size = 0x4, offset = 0x4, fixed_abs, tag = 'smem constant byte address 0x4 - core index']
  #allocation1 [shape = 'u32[144,128]{1,0:T(1,128)}', space=vmem, size = 0x12000, scoped, tag = 'internal scratch']
  #allocation2 [shape = 'f32[256,128]{1,0:T(8,128)}', space=vmem, size = 0x20000, scoped, tag = 'scratch operand']
  %s0 = inlined_call_operand.vmem [shape: bf16[768,768], index: 0, kind: input, shape index: {}]
  %s1 = inlined_call_operand.vmem [shape: bf16[768,128], index: 1, kind: input, shape index: {}]
  %s2 = inlined_call_operand.vmem [shape: bf16[128,128], index: 2, kind: input, shape index: {}]
  %s3 = inlined_call_operand.vmem [shape: f32[1,128], index: 3, kind: input, shape index: {}]
  %s4 = inlined_call_operand.vmem [shape: bf16[768,128], index: 4, kind: output, shape index: {}]
  %s5 = sld [smem:[#allocation0]]
  $region95: #{resgcn_forward.3} parent=0
    _
  %s7 = ssub.s32 1, %s5
  %s8 = scalar_select 0, %s7, %s5
  $region1: #{resgcn_forward.3} parent=0
    #allocation3 [shape = 'u8[262144]{0}', space=vmem, size = 0x40000, scoped, tag = 'input window, operand 0']
    loop: start=0, step=1, limit=11
    $region2: #{resgcn_forward.3} parent=1 // loop_pre_header
      _
    $region3: #{resgcn_forward.3} parent=1 // loop_header
      %s10 = sphi 0, %s14
      %p11 = scmp.ge.s32.totalorder %s10, 11
      %s17 = sphi 0, %s29
      %s18 = sphi 0, %s25
      %s19 = sphi 0, %s17
      %s20 = sphi 0, %s18
      %s21 = sphi 0, %s19
      %s22 = sphi 0, %s20
      %s34 = sphi 0, %s36
      %s37 = sphi 0, %s34
      %s38 = sphi 0, %s37
      %s54 = sphi 0, %s38
      %s58 = sphi 0, %s58
      %s60 = sphi 0, %s58
      %s61 = sphi 0, %s60
      %s75 = sphi 0, %s61
      %s79 = sphi 0, %s79
      %s81 = sphi 0, %s79
      %s82 = sphi 0, %s81
      %s96 = sphi 0, %s82
      %s100 = sphi 0, %s100
      %s102 = sphi 0, %s100
      %s103 = sphi 0, %s102
      %s117 = sphi 0, %s103
      %s123 = sphi 0, %s125
      %s126 = sphi 0, %s123
      %s127 = sphi 0, %s126
      %s143 = sphi 0, %s127
    $region4: #{resgcn_forward.3} parent=1 // loop_header_branch
      %13 = sbr.rel (%p11) target = $region8
    $region5: #{resgcn_forward.3} parent=1 // loop_body
      %s15 = ssub.s32 %s10, 1
      %s16 = ssub.s32 %s10, 2
      %s23 = sadd.s32 1, %s18
      %p24 = scmp.ge.s32.totalorder %s23, 3
      %s25 = scalar_select %p24, 0, %s23
      %s26 = sadd.s32 1, %s17
      %s27 = scalar_select %p24, %s26, %s17
      %p28 = scmp.ge.s32.totalorder %s27, 3
      %s29 = scalar_select %p28, 0, %s27
      %s30 = ssub.s32 %s17, %s29
      %s31 = ssub.s32 %s18, %s25
      %s32 = sor.u32 %s30, %s31
      %p33 = scmp.eq.s32.totalorder %s32, 0
      %s35 = sadd.s32 %s34, 1
      %s36 = scalar_select %p33, %s34, %s35
      %p39 = pneg %p33
      %p40 = scmp.eq.s32.totalorder %s10, 8
      %p41 = por %p39, %p40
      %p42 = scmp.ne.s32.totalorder %s34, %s37
      %p43 = scmp.eq.s32.totalorder %s10, 0
      %p44 = por %p42, %p43
      %p45 = scmp.ne.s32.totalorder %s34, %s37
      %p46 = scmp.eq.s32.totalorder %s15, 8
      %p47 = por %p45, %p46
      %p48 = scmp.ne.s32.totalorder %s37, %s38
      %p49 = scmp.eq.s32.totalorder %s15, 0
      %p50 = por %p48, %p49
      %p51 = scmp.ne.s32.totalorder %s37, %s38
      %p52 = scmp.eq.s32.totalorder %s16, 8
      %p53 = por %p51, %p52
      %p55 = scmp.ne.s32.totalorder %s38, %s54
      %p56 = scmp.eq.s32.totalorder %s16, 0
      %p57 = por %p55, %p56
      %s59 = sadd.s32 %s58, 1
      %p62 = scmp.eq.s32.totalorder %s10, 8
      %p63 = scmp.ne.s32.totalorder %s58, %s60
      %p64 = scmp.eq.s32.totalorder %s10, 0
      %p65 = por %p63, %p64
      %p66 = scmp.ne.s32.totalorder %s58, %s60
      %p67 = scmp.eq.s32.totalorder %s15, 8
      %p68 = por %p66, %p67
      %p69 = scmp.ne.s32.totalorder %s60, %s61
      %p70 = scmp.eq.s32.totalorder %s15, 0
      %p71 = por %p69, %p70
      %p72 = scmp.ne.s32.totalorder %s60, %s61
      %p73 = scmp.eq.s32.totalorder %s16, 8
      %p74 = por %p72, %p73
      %p76 = scmp.ne.s32.totalorder %s61, %s75
      %p77 = scmp.eq.s32.totalorder %s16, 0
      %p78 = por %p76, %p77
      %s80 = sadd.s32 %s79, 1
      %p83 = scmp.eq.s32.totalorder %s10, 8
      %p84 = scmp.ne.s32.totalorder %s79, %s81
      %p85 = scmp.eq.s32.totalorder %s10, 0
      %p86 = por %p84, %p85
      %p87 = scmp.ne.s32.totalorder %s79, %s81
      %p88 = scmp.eq.s32.totalorder %s15, 8
      %p89 = por %p87, %p88
      %p90 = scmp.ne.s32.totalorder %s81, %s82
      %p91 = scmp.eq.s32.totalorder %s15, 0
      %p92 = por %p90, %p91
      %p93 = scmp.ne.s32.totalorder %s81, %s82
      %p94 = scmp.eq.s32.totalorder %s16, 8
      %p95 = por %p93, %p94
      %p97 = scmp.ne.s32.totalorder %s82, %s96
      %p98 = scmp.eq.s32.totalorder %s16, 0
      %p99 = por %p97, %p98
      %s101 = sadd.s32 %s100, 1
      %p104 = scmp.eq.s32.totalorder %s10, 8
      %p105 = scmp.ne.s32.totalorder %s100, %s102
      %p106 = scmp.eq.s32.totalorder %s10, 0
      %p107 = por %p105, %p106
      %p108 = scmp.ne.s32.totalorder %s100, %s102
      %p109 = scmp.eq.s32.totalorder %s15, 8
      %p110 = por %p108, %p109
      %p111 = scmp.ne.s32.totalorder %s102, %s103
      %p112 = scmp.eq.s32.totalorder %s15, 0
      %p113 = por %p111, %p112
      %p114 = scmp.ne.s32.totalorder %s102, %s103
      %p115 = scmp.eq.s32.totalorder %s16, 8
      %p116 = por %p114, %p115
      %p118 = scmp.ne.s32.totalorder %s103, %s117
      %p119 = scmp.eq.s32.totalorder %s16, 0
      %p120 = por %p118, %p119
      %s121 = ssub.s32 %s17, %s29
      %p122 = scmp.eq.s32.totalorder %s121, 0
      %s124 = sadd.s32 %s123, 1
      %s125 = scalar_select %p122, %s123, %s124
      %p128 = pneg %p122
      %p129 = scmp.eq.s32.totalorder %s10, 8
      %p130 = por %p128, %p129
      %p131 = scmp.ne.s32.totalorder %s123, %s126
      %p132 = scmp.eq.s32.totalorder %s10, 0
      %p133 = por %p131, %p132
      %p134 = scmp.ne.s32.totalorder %s123, %s126
      %p135 = scmp.eq.s32.totalorder %s15, 8
      %p136 = por %p134, %p135
      %p137 = scmp.ne.s32.totalorder %s126, %s127
      %p138 = scmp.eq.s32.totalorder %s15, 0
      %p139 = por %p137, %p138
      %p140 = scmp.ne.s32.totalorder %s126, %s127
      %p141 = scmp.eq.s32.totalorder %s16, 8
      %p142 = por %p140, %p141
      %p144 = scmp.ne.s32.totalorder %s127, %s143
      %p145 = scmp.eq.s32.totalorder %s16, 0
      %p146 = por %p144, %p145
      %p147 = scmp.le.s32.totalorder 1, %s10
      %p148 = scmp.lt.s32.totalorder %s10, 10
      %p149 = pnand %p147, %p148
      %p150 = pneg %p149
      // Predicated region
      $region9: #{resgcn_forward.3} parent=5 // pred_check
        _
      $region10: #{resgcn_forward.3} parent=5 // pred_check_branch
        %152 = sbr.rel (%p149) target = $region12
      $region11: #{resgcn_forward.3} parent=5 // pred_region
        %s153 = ssub.s32 %s10, 1
        // Predicated region
        $region13: #{resgcn_forward.3} parent=11 // pred_check
          %p154 = pneg %p71
        $region14: #{resgcn_forward.3} parent=11 // pred_check_branch
          %156 = sbr.rel (%p154) target = $region16
        $region15: #{resgcn_forward.3} parent=11 // pred_region
          _
        $region16: #{resgcn_forward.3} parent=11 // pred_fallthru
          _
        // Predicated region
        $region17: #{resgcn_forward.3} parent=11 // pred_check
          %p157 = pneg %p92
        $region18: #{resgcn_forward.3} parent=11 // pred_check_branch
          %159 = sbr.rel (%p157) target = $region20
        $region19: #{resgcn_forward.3} parent=11 // pred_region
          _
        $region20: #{resgcn_forward.3} parent=11 // pred_fallthru
          _
        // Predicated region
        $region21: #{resgcn_forward.3} parent=11 // pred_check
          %p160 = pneg %p113
        $region22: #{resgcn_forward.3} parent=11 // pred_check_branch
          %162 = sbr.rel (%p160) target = $region24
        $region23: #{resgcn_forward.3} parent=11 // pred_region
          _
        $region24: #{resgcn_forward.3} parent=11 // pred_fallthru
          _
      $region12: #{resgcn_forward.3} parent=5 // pred_fallthru
        _
      %p163 = scmp.lt.s32.totalorder %s10, 9
      // Predicated region
      $region25: #{resgcn_forward.3} parent=5 // pred_check
        %p164 = pneg %p163
      $region26: #{resgcn_forward.3} parent=5 // pred_check_branch
        %166 = sbr.rel (%p164) target = $region28
      $region27: #{resgcn_forward.3} parent=5 // pred_region
        // Predicated region
        $region29: #{resgcn_forward.3} parent=27 // pred_check
          %p167 = pneg %p44
        $region30: #{resgcn_forward.3} parent=27 // pred_check_branch
          %169 = sbr.rel (%p167) target = $region32
        $region31: #{resgcn_forward.3} parent=27 // pred_region
          %s170 = sand.u32 %s34, 1
          %s171 = sand.u32 %s34, 1
          %s172 = smul.addr %s171, 256
          %s173 = scalar_lea.vmem [#allocation3], %s172
          %s174 = smul.u32 32, %s17
          %s175 = smul.u32 2, %s18
          %s176 = smul.addr %s174, 6
          %s177 = sadd.s32 %s175, %s176
          %s178 = smul.addr %s177, 4
          %s179 = scalar_lea.vmem %s0, %s178
          // Predicated region
          $region33: #{resgcn_forward.3} parent=31 // pred_check
            _
          $region34: #{resgcn_forward.3} parent=31 // pred_check_branch
            %181 = sbr.rel (0) target = $region36
          $region35: #{resgcn_forward.3} parent=31 // pred_region
            // Predicated region
            $region37: #{resgcn_forward.3} parent=35 // pred_check
              _
            $region38: #{resgcn_forward.3} parent=35 // pred_check_branch
              %183 = sbr.rel (0) target = $region40
            $region39: #{resgcn_forward.3} parent=35 // pred_region
              // Predicated region
              $region52: #{resgcn_forward.3} parent=39 // pred_check
                _
              $region53: #{resgcn_forward.3} parent=39 // pred_check_branch
                %260 = sbr.rel (0) target = $region55
              $region54: #{resgcn_forward.3} parent=39 // pred_region
                loop: start=0, step=1, limit=1
                $region56: #{resgcn_forward.3} parent=54 // loop_pre_header
                  _
                $region57: #{resgcn_forward.3} parent=54 // loop_header
                  %s262 = sphi 0, %s266
                  %p263 = scmp.ge.s32.totalorder %s262, 1
                  %s267 = sphi %s179, %s179
                  %s268 = sphi %s173, %s173
                $region58: #{resgcn_forward.3} parent=54 // loop_header_branch
                  %265 = sbr.rel (%p263) target = $region62
                $region59: #{resgcn_forward.3} parent=54 // loop_body
                  %v269 = vld [vmem:[%s267] sm:$0xff]
                  %270 = vst [vmem:[%s268] sm:$0xff] %v269
                  %v271 = vld [vmem:[%s267 + $0x18] sm:$0xff]
                  %272 = vst [vmem:[%s268 + $0x8] sm:$0xff] %v271
                  %v273 = vld [vmem:[%s267 + $0x30] sm:$0xff]
                  %274 = vst [vmem:[%s268 + $0x10] sm:$0xff] %v273
                  %v275 = vld [vmem:[%s267 + $0x48] sm:$0xff]
                  %276 = vst [vmem:[%s268 + $0x18] sm:$0xff] %v275
                  %v277 = vld [vmem:[%s267 + $0x60] sm:$0xff]
                  %278 = vst [vmem:[%s268 + $0x20] sm:$0xff] %v277
                  %v279 = vld [vmem:[%s267 + $0x78] sm:$0xff]
                  %280 = vst [vmem:[%s268 + $0x28] sm:$0xff] %v279
                  %v281 = vld [vmem:[%s267 + $0x90] sm:$0xff]
                  %282 = vst [vmem:[%s268 + $0x30] sm:$0xff] %v281
                  %v283 = vld [vmem:[%s267 + $0xa8] sm:$0xff]
                  %284 = vst [vmem:[%s268 + $0x38] sm:$0xff] %v283
                  %v285 = vld [vmem:[%s267 + $0xc0] sm:$0xff]
                  %286 = vst [vmem:[%s268 + $0x40] sm:$0xff] %v285
                  %v287 = vld [vmem:[%s267 + $0xd8] sm:$0xff]
                  %288 = vst [vmem:[%s268 + $0x48] sm:$0xff] %v287
                  %v289 = vld [vmem:[%s267 + $0xf0] sm:$0xff]
                  %290 = vst [vmem:[%s268 + $0x50] sm:$0xff] %v289
                  %v291 = vld [vmem:[%s267 + $0x108] sm:$0xff]
                  %292 = vst [vmem:[%s268 + $0x58] sm:$0xff] %v291
                  %v293 = vld [vmem:[%s267 + $0x120] sm:$0xff]
                  %294 = vst [vmem:[%s268 + $0x60] sm:$0xff] %v293
                  %v295 = vld [vmem:[%s267 + $0x138] sm:$0xff]
                  %296 = vst [vmem:[%s268 + $0x68] sm:$0xff] %v295
                  %v297 = vld [vmem:[%s267 + $0x150] sm:$0xff]
                  %298 = vst [vmem:[%s268 + $0x70] sm:$0xff] %v297
                  %v299 = vld [vmem:[%s267 + $0x168] sm:$0xff]
                  %300 = vst [vmem:[%s268 + $0x78] sm:$0xff] %v299
                  %v301 = vld [vmem:[%s267 + $0x180] sm:$0xff]
                  %302 = vst [vmem:[%s268 + $0x80] sm:$0xff] %v301
                  %v303 = vld [vmem:[%s267 + $0x198] sm:$0xff]
                  %304 = vst [vmem:[%s268 + $0x88] sm:$0xff] %v303
                  %v305 = vld [vmem:[%s267 + $0x1b0] sm:$0xff]
                  %306 = vst [vmem:[%s268 + $0x90] sm:$0xff] %v305
                  %v307 = vld [vmem:[%s267 + $0x1c8] sm:$0xff]
                  %308 = vst [vmem:[%s268 + $0x98] sm:$0xff] %v307
                  %v309 = vld [vmem:[%s267 + $0x1e0] sm:$0xff]
                  %310 = vst [vmem:[%s268 + $0xa0] sm:$0xff] %v309
                  %v311 = vld [vmem:[%s267 + $0x1f8] sm:$0xff]
                  %312 = vst [vmem:[%s268 + $0xa8] sm:$0xff] %v311
                  %v313 = vld [vmem:[%s267 + $0x210] sm:$0xff]
                  %314 = vst [vmem:[%s268 + $0xb0] sm:$0xff] %v313
                  %v315 = vld [vmem:[%s267 + $0x228] sm:$0xff]
                  %316 = vst [vmem:[%s268 + $0xb8] sm:$0xff] %v315
                  %v317 = vld [vmem:[%s267 + $0x240] sm:$0xff]
                  %318 = vst [vmem:[%s268 + $0xc0] sm:$0xff] %v317
                  %v319 = vld [vmem:[%s267 + $0x258] sm:$0xff]
                  %320 = vst [vmem:[%s268 + $0xc8] sm:$0xff] %v319
                  %v321 = vld [vmem:[%s267 + $0x270] sm:$0xff]
                  %322 = vst [vmem:[%s268 + $0xd0] sm:$0xff] %v321
                  %v323 = vld [vmem:[%s267 + $0x288] sm:$0xff]
                  %324 = vst [vmem:[%s268 + $0xd8] sm:$0xff] %v323
                  %v325 = vld [vmem:[%s267 + $0x2a0] sm:$0xff]
                  %326 = vst [vmem:[%s268 + $0xe0] sm:$0xff] %v325
                  %v327 = vld [vmem:[%s267 + $0x2b8] sm:$0xff]
                  %328 = vst [vmem:[%s268 + $0xe8] sm:$0xff] %v327
                  %v329 = vld [vmem:[%s267 + $0x2d0] sm:$0xff]
                  %330 = vst [vmem:[%s268 + $0xf0] sm:$0xff] %v329
                  %v331 = vld [vmem:[%s267 + $0x2e8] sm:$0xff]
                  %332 = vst [vmem:[%s268 + $0xf8] sm:$0xff] %v331
                $region60: #{resgcn_forward.3} parent=54 // loop_footer
                  %s266 = sadd.s32 1, %s262
                $region61: #{resgcn_forward.3} parent=54 // loop_footer_branch
                  %261 = sbr.rel target = $region57
                $region62: #{resgcn_forward.3} parent=54 // loop_exit
                  _
              $region55: #{resgcn_forward.3} parent=39 // pred_fallthru
                _
              // Predicated region
              $region63: #{resgcn_forward.3} parent=39 // pred_check
                _
              $region64: #{resgcn_forward.3} parent=39 // pred_check_branch
                %334 = sbr.rel target = $region66
              $region65: #{resgcn_forward.3} parent=39 // pred_region
                _
              $region66: #{resgcn_forward.3} parent=39 // pred_fallthru
                _
            $region40: #{resgcn_forward.3} parent=35 // pred_fallthru
              _
            // Predicated region
            $region41: #{resgcn_forward.3} parent=35 // pred_check
              _
            $region42: #{resgcn_forward.3} parent=35 // pred_check_branch
              %185 = sbr.rel target = $region44
            $region43: #{resgcn_forward.3} parent=35 // pred_region
              loop: start=0, step=1, limit=1
              $region45: #{resgcn_forward.3} parent=43 // loop_pre_header
                _
              $region46: #{resgcn_forward.3} parent=43 // loop_header
                %s188 = sphi 0, %s192
                %p189 = scmp.ge.s32.totalorder %s188, 1
                %s193 = sphi %s179, %s179
                %s194 = sphi %s173, %s173
              $region47: #{resgcn_forward.3} parent=43 // loop_header_branch
                %191 = sbr.rel (%p189) target = $region51
              $region48: #{resgcn_forward.3} parent=43 // loop_body
                %v195 = vld [vmem:[%s193] sm:$0xff]
                %196 = vst [vmem:[%s194] sm:$0xff] %v195
                %v197 = vld [vmem:[%s193 + $0x18] sm:$0xff]
                %198 = vst [vmem:[%s194 + $0x8] sm:$0xff] %v197
                %v199 = vld [vmem:[%s193 + $0x30] sm:$0xff]
                %200 = vst [vmem:[%s194 + $0x10] sm:$0xff] %v199
                %v201 = vld [vmem:[%s193 + $0x48] sm:$0xff]
                %202 = vst [vmem:[%s194 + $0x18] sm:$0xff] %v201
                %v203 = vld [vmem:[%s193 + $0x60] sm:$0xff]
                %204 = vst [vmem:[%s194 + $0x20] sm:$0xff] %v203
                %v205 = vld [vmem:[%s193 + $0x78] sm:$0xff]
                %206 = vst [vmem:[%s194 + $0x28] sm:$0xff] %v205
                %v207 = vld [vmem:[%s193 + $0x90] sm:$0xff]
                %208 = vst [vmem:[%s194 + $0x30] sm:$0xff] %v207
                %v209 = vld [vmem:[%s193 + $0xa8] sm:$0xff]
                %210 = vst [vmem:[%s194 + $0x38] sm:$0xff] %v209
                %v211 = vld [vmem:[%s193 + $0xc0] sm:$0xff]
                %212 = vst [vmem:[%s194 + $0x40] sm:$0xff] %v211
                %v213 = vld [vmem:[%s193 + $0xd8] sm:$0xff]
                %214 = vst [vmem:[%s194 + $0x48] sm:$0xff] %v213
                %v215 = vld [vmem:[%s193 + $0xf0] sm:$0xff]
                %216 = vst [vmem:[%s194 + $0x50] sm:$0xff] %v215
                %v217 = vld [vmem:[%s193 + $0x108] sm:$0xff]
                %218 = vst [vmem:[%s194 + $0x58] sm:$0xff] %v217
                %v219 = vld [vmem:[%s193 + $0x120] sm:$0xff]
                %220 = vst [vmem:[%s194 + $0x60] sm:$0xff] %v219
                %v221 = vld [vmem:[%s193 + $0x138] sm:$0xff]
                %222 = vst [vmem:[%s194 + $0x68] sm:$0xff] %v221
                %v223 = vld [vmem:[%s193 + $0x150] sm:$0xff]
                %224 = vst [vmem:[%s194 + $0x70] sm:$0xff] %v223
                %v225 = vld [vmem:[%s193 + $0x168] sm:$0xff]
                %226 = vst [vmem:[%s194 + $0x78] sm:$0xff] %v225
                %v227 = vld [vmem:[%s193 + $0x180] sm:$0xff]
                %228 = vst [vmem:[%s194 + $0x80] sm:$0xff] %v227
                %v229 = vld [vmem:[%s193 + $0x198] sm:$0xff]
                %230 = vst [vmem:[%s194 + $0x88] sm:$0xff] %v229
                %v231 = vld [vmem:[%s193 + $0x1b0] sm:$0xff]
                %232 = vst [vmem:[%s194 + $0x90] sm:$0xff] %v231
                %v233 = vld [vmem:[%s193 + $0x1c8] sm:$0xff]
                %234 = vst [vmem:[%s194 + $0x98] sm:$0xff] %v233
                %v235 = vld [vmem:[%s193 + $0x1e0] sm:$0xff]
                %236 = vst [vmem:[%s194 + $0xa0] sm:$0xff] %v235
                %v237 = vld [vmem:[%s193 + $0x1f8] sm:$0xff]
                %238 = vst [vmem:[%s194 + $0xa8] sm:$0xff] %v237
                %v239 = vld [vmem:[%s193 + $0x210] sm:$0xff]
                %240 = vst [vmem:[%s194 + $0xb0] sm:$0xff] %v239
                %v241 = vld [vmem:[%s193 + $0x228] sm:$0xff]
                %242 = vst [vmem:[%s194 + $0xb8] sm:$0xff] %v241
                %v243 = vld [vmem:[%s193 + $0x240] sm:$0xff]
                %244 = vst [vmem:[%s194 + $0xc0] sm:$0xff] %v243
                %v245 = vld [vmem:[%s193 + $0x258] sm:$0xff]
                %246 = vst [vmem:[%s194 + $0xc8] sm:$0xff] %v245
                %v247 = vld [vmem:[%s193 + $0x270] sm:$0xff]
                %248 = vst [vmem:[%s194 + $0xd0] sm:$0xff] %v247
                %v249 = vld [vmem:[%s193 + $0x288] sm:$0xff]
                %250 = vst [vmem:[%s194 + $0xd8] sm:$0xff] %v249
                %v251 = vld [vmem:[%s193 + $0x2a0] sm:$0xff]
                %252 = vst [vmem:[%s194 + $0xe0] sm:$0xff] %v251
                %v253 = vld [vmem:[%s193 + $0x2b8] sm:$0xff]
                %254 = vst [vmem:[%s194 + $0xe8] sm:$0xff] %v253
                %v255 = vld [vmem:[%s193 + $0x2d0] sm:$0xff]
                %256 = vst [vmem:[%s194 + $0xf0] sm:$0xff] %v255
                %v257 = vld [vmem:[%s193 + $0x2e8] sm:$0xff]
                %258 = vst [vmem:[%s194 + $0xf8] sm:$0xff] %v257
              $region49: #{resgcn_forward.3} parent=43 // loop_footer
                %s192 = sadd.s32 1, %s188
              $region50: #{resgcn_forward.3} parent=43 // loop_footer_branch
                %187 = sbr.rel target = $region46
              $region51: #{resgcn_forward.3} parent=43 // loop_exit
                _
            $region44: #{resgcn_forward.3} parent=35 // pred_fallthru
              _
          $region36: #{resgcn_forward.3} parent=31 // pred_fallthru
            _
          %335 = vnop
        $region32: #{resgcn_forward.3} parent=27 // pred_fallthru
          _
      $region28: #{resgcn_forward.3} parent=5 // pred_fallthru
        _
      %p336 = scmp.le.s32.totalorder 1, %s10
      %p337 = scmp.lt.s32.totalorder %s10, 10
      %p338 = pnand %p336, %p337
      %p339 = pneg %p338
      // Predicated region
      $region67: #{resgcn_forward.3} parent=5 // pred_check
        _
      $region68: #{resgcn_forward.3} parent=5 // pred_check_branch
        %341 = sbr.rel (%p338) target = $region70
      $region69: #{resgcn_forward.3} parent=5 // pred_region
        %s342 = ssub.s32 %s10, 1
        %s343 = sand.u32 %s37, 1
        %s344 = sand.u32 %s37, 1
        %s345 = smul.addr %s344, 256
        %s346 = scalar_lea.vmem [#allocation3], %s345
        // Predicated region
        $region71: #{resgcn_forward.3} parent=69 // pred_check
          %p347 = pneg %p50
        $region72: #{resgcn_forward.3} parent=69 // pred_check_branch
          %349 = sbr.rel (%p347) target = $region74
        $region73: #{resgcn_forward.3} parent=69 // pred_region
          _
        $region74: #{resgcn_forward.3} parent=69 // pred_fallthru
          _
        %s350 = sand.u32 %s37, 1
        %s351 = sand.u32 %s37, 1
        %s352 = smul.addr %s351, 256
        %s353 = scalar_lea.vmem [#allocation3], %s352
        %p354 = pneg %p50
        %p355 = pneg %p47
        %p356 = pneg %p71
        %p357 = pneg %p68
        %p358 = pneg %p92
        %p359 = pneg %p89
        %p360 = pneg %p113
        %p361 = pneg %p110
        %p362 = pneg %p139
        %p363 = pneg %p136
        %s364 = smul.u32 32, %s19
        %p365 = scmp.lt.s32.totalorder %s364, 95
        %s366 = scalar_select %p365, %s364, 95
        %s367 = smul.addr %s366, 4
        %s368 = scalar_lea.vmem %s4, %s367
        %s369 = smul.u32 32, %s19
        %s370 = smul.u32 2, %s20
        %s371 = smul.u32 32, %s19
        %p372 = scmp.lt.s32.totalorder %s371, 95
        %s373 = scalar_select %p372, %s371, 95
        %s374 = smul.addr %s373, 4
        %s375 = scalar_lea.vmem %s4, %s374
        %s376 = smul.u32 32, %s19
        %p378 = scmp.eq.s32.totalorder %s20, 0
        // Predicated region
        $region75: #{resgcn_forward.3} parent=69 // pred_check
          %p379 = pneg %p378
        $region76: #{resgcn_forward.3} parent=69 // pred_check_branch
          %381 = sbr.rel (%p379) target = $region78
        $region77: #{resgcn_forward.3} parent=69 // pred_region
          %382 = vst [vmem:[#allocation2] sm:$0xff] 0.0
          %383 = vst [vmem:[#allocation2 + $0x8] sm:$0xff] 0.0
          %384 = vst [vmem:[#allocation2 + $0x10] sm:$0xff] 0.0
          %385 = vst [vmem:[#allocation2 + $0x18] sm:$0xff] 0.0
          %386 = vst [vmem:[#allocation2 + $0x20] sm:$0xff] 0.0
          %387 = vst [vmem:[#allocation2 + $0x28] sm:$0xff] 0.0
          %388 = vst [vmem:[#allocation2 + $0x30] sm:$0xff] 0.0
          %389 = vst [vmem:[#allocation2 + $0x38] sm:$0xff] 0.0
          %390 = vst [vmem:[#allocation2 + $0x40] sm:$0xff] 0.0
          %391 = vst [vmem:[#allocation2 + $0x48] sm:$0xff] 0.0
          %392 = vst [vmem:[#allocation2 + $0x50] sm:$0xff] 0.0
          %393 = vst [vmem:[#allocation2 + $0x58] sm:$0xff] 0.0
          %394 = vst [vmem:[#allocation2 + $0x60] sm:$0xff] 0.0
          %395 = vst [vmem:[#allocation2 + $0x68] sm:$0xff] 0.0
          %396 = vst [vmem:[#allocation2 + $0x70] sm:$0xff] 0.0
          %397 = vst [vmem:[#allocation2 + $0x78] sm:$0xff] 0.0
          %398 = vst [vmem:[#allocation2 + $0x80] sm:$0xff] 0.0
          %399 = vst [vmem:[#allocation2 + $0x88] sm:$0xff] 0.0
          %400 = vst [vmem:[#allocation2 + $0x90] sm:$0xff] 0.0
          %401 = vst [vmem:[#allocation2 + $0x98] sm:$0xff] 0.0
          %402 = vst [vmem:[#allocation2 + $0xa0] sm:$0xff] 0.0
          %403 = vst [vmem:[#allocation2 + $0xa8] sm:$0xff] 0.0
          %404 = vst [vmem:[#allocation2 + $0xb0] sm:$0xff] 0.0
          %405 = vst [vmem:[#allocation2 + $0xb8] sm:$0xff] 0.0
          %406 = vst [vmem:[#allocation2 + $0xc0] sm:$0xff] 0.0
          %407 = vst [vmem:[#allocation2 + $0xc8] sm:$0xff] 0.0
          %408 = vst [vmem:[#allocation2 + $0xd0] sm:$0xff] 0.0
          %409 = vst [vmem:[#allocation2 + $0xd8] sm:$0xff] 0.0
          %410 = vst [vmem:[#allocation2 + $0xe0] sm:$0xff] 0.0
          %411 = vst [vmem:[#allocation2 + $0xe8] sm:$0xff] 0.0
          %412 = vst [vmem:[#allocation2 + $0xf0] sm:$0xff] 0.0
          %413 = vst [vmem:[#allocation2 + $0xf8] sm:$0xff] 0.0
        $region78: #{resgcn_forward.3} parent=69 // pred_fallthru
          _
        %s414 = smul.u32 %s20, 256
        %s415 = sshra.s32 %s414, 3
        %s416 = sand.u32 %s414, 7
        %s417 = smul.addr %s415, 4
        %s418 = scalar_lea.vmem %s1, %s417
        %v419 = vld [vmem:[%s418] sm:$0xf]
        %v420 = vld [vmem:[%s418 + $0x4] sm:$0xf]
        %v421 = vld [vmem:[%s418 + $0x8] sm:$0xf]
        %v422 = vld [vmem:[%s418 + $0xc] sm:$0xf]
        %v423 = vld [vmem:[%s418 + $0x10] sm:$0xf]
        %v424 = vld [vmem:[%s418 + $0x14] sm:$0xf]
        %v425 = vld [vmem:[%s418 + $0x18] sm:$0xf]
        %v426 = vld [vmem:[%s418 + $0x1c] sm:$0xf]
        %v427 = vld [vmem:[%s418 + $0x20] sm:$0xf]
        %v428 = vld [vmem:[%s418 + $0x24] sm:$0xf]
        %v429 = vld [vmem:[%s418 + $0x28] sm:$0xf]
        %v430 = vld [vmem:[%s418 + $0x2c] sm:$0xf]
        %v431 = vld [vmem:[%s418 + $0x30] sm:$0xf]
        %v432 = vld [vmem:[%s418 + $0x34] sm:$0xf]
        %v433 = vld [vmem:[%s418 + $0x38] sm:$0xf]
        %v434 = vld [vmem:[%s418 + $0x3c] sm:$0xf]
        %v435 = vld [vmem:[%s418 + $0x40] sm:$0xf]
        %v436 = vld [vmem:[%s418 + $0x44] sm:$0xf]
        %v437 = vld [vmem:[%s418 + $0x48] sm:$0xf]
        %v438 = vld [vmem:[%s418 + $0x4c] sm:$0xf]
        %v439 = vld [vmem:[%s418 + $0x50] sm:$0xf]
        %v440 = vld [vmem:[%s418 + $0x54] sm:$0xf]
        %v441 = vld [vmem:[%s418 + $0x58] sm:$0xf]
        %v442 = vld [vmem:[%s418 + $0x5c] sm:$0xf]
        %v443 = vld [vmem:[%s418 + $0x60] sm:$0xf]
        %v444 = vld [vmem:[%s418 + $0x64] sm:$0xf]
        %v445 = vld [vmem:[%s418 + $0x68] sm:$0xf]
        %v446 = vld [vmem:[%s418 + $0x6c] sm:$0xf]
        %v447 = vld [vmem:[%s418 + $0x70] sm:$0xf]
        %v448 = vld [vmem:[%s418 + $0x74] sm:$0xf]
        %v449 = vld [vmem:[%s418 + $0x78] sm:$0xf]
        %v450 = vld [vmem:[%s418 + $0x7c] sm:$0xf]
        %v451 = vld [vmem:[#allocation2] sm:$0xff]
        %v452 = vld [vmem:[#allocation2 + $0x8] sm:$0xff]
        %v453 = vld [vmem:[#allocation2 + $0x10] sm:$0xff]
        %v454 = vld [vmem:[#allocation2 + $0x18] sm:$0xff]
        %v455 = vld [vmem:[#allocation2 + $0x20] sm:$0xff]
        %v456 = vld [vmem:[#allocation2 + $0x28] sm:$0xff]
        %v457 = vld [vmem:[#allocation2 + $0x30] sm:$0xff]
        %v458 = vld [vmem:[#allocation2 + $0x38] sm:$0xff]
        %v459 = vld [vmem:[#allocation2 + $0x40] sm:$0xff]
        %v460 = vld [vmem:[#allocation2 + $0x48] sm:$0xff]
        %v461 = vld [vmem:[#allocation2 + $0x50] sm:$0xff]
        %v462 = vld [vmem:[#allocation2 + $0x58] sm:$0xff]
        %v463 = vld [vmem:[#allocation2 + $0x60] sm:$0xff]
        %v464 = vld [vmem:[#allocation2 + $0x68] sm:$0xff]
        %v465 = vld [vmem:[#allocation2 + $0x70] sm:$0xff]
        %v466 = vld [vmem:[#allocation2 + $0x78] sm:$0xff]
        %v467 = vld [vmem:[#allocation2 + $0x80] sm:$0xff]
        %v468 = vld [vmem:[#allocation2 + $0x88] sm:$0xff]
        %v469 = vld [vmem:[#allocation2 + $0x90] sm:$0xff]
        %v470 = vld [vmem:[#allocation2 + $0x98] sm:$0xff]
        %v471 = vld [vmem:[#allocation2 + $0xa0] sm:$0xff]
        %v472 = vld [vmem:[#allocation2 + $0xa8] sm:$0xff]
        %v473 = vld [vmem:[#allocation2 + $0xb0] sm:$0xff]
        %v474 = vld [vmem:[#allocation2 + $0xb8] sm:$0xff]
        %v475 = vld [vmem:[#allocation2 + $0xc0] sm:$0xff]
        %v476 = vld [vmem:[#allocation2 + $0xc8] sm:$0xff]
        %v477 = vld [vmem:[#allocation2 + $0xd0] sm:$0xff]
        %v478 = vld [vmem:[#allocation2 + $0xd8] sm:$0xff]
        %v479 = vld [vmem:[#allocation2 + $0xe0] sm:$0xff]
        %v480 = vld [vmem:[#allocation2 + $0xe8] sm:$0xff]
        %v481 = vld [vmem:[#allocation2 + $0xf0] sm:$0xff]
        %v482 = vld [vmem:[#allocation2 + $0xf8] sm:$0xff]
        %v483 = vld [vmem:[%s346] sm:$0xff]
        %v484 = vld [vmem:[%s346 + $0x8] sm:$0xff]
        %v485 = vld [vmem:[%s346 + $0x10] sm:$0xff]
        %v486 = vld [vmem:[%s346 + $0x18] sm:$0xff]
        %v487 = vld [vmem:[%s346 + $0x20] sm:$0xff]
        %v488 = vld [vmem:[%s346 + $0x28] sm:$0xff]
        %v489 = vld [vmem:[%s346 + $0x30] sm:$0xff]
        %v490 = vld [vmem:[%s346 + $0x38] sm:$0xff]
        %v491 = vld [vmem:[%s346 + $0x40] sm:$0xff]
        %v492 = vld [vmem:[%s346 + $0x48] sm:$0xff]
        %v493 = vld [vmem:[%s346 + $0x50] sm:$0xff]
        %v494 = vld [vmem:[%s346 + $0x58] sm:$0xff]
        %v495 = vld [vmem:[%s346 + $0x60] sm:$0xff]
        %v496 = vld [vmem:[%s346 + $0x68] sm:$0xff]
        %v497 = vld [vmem:[%s346 + $0x70] sm:$0xff]
        %v498 = vld [vmem:[%s346 + $0x78] sm:$0xff]
        %v499 = vld [vmem:[%s346 + $0x80] sm:$0xff]
        %v500 = vld [vmem:[%s346 + $0x88] sm:$0xff]
        %v501 = vld [vmem:[%s346 + $0x90] sm:$0xff]
        %v502 = vld [vmem:[%s346 + $0x98] sm:$0xff]
        %v503 = vld [vmem:[%s346 + $0xa0] sm:$0xff]
        %v504 = vld [vmem:[%s346 + $0xa8] sm:$0xff]
        %v505 = vld [vmem:[%s346 + $0xb0] sm:$0xff]
        %v506 = vld [vmem:[%s346 + $0xb8] sm:$0xff]
        %v507 = vld [vmem:[%s346 + $0xc0] sm:$0xff]
        %v508 = vld [vmem:[%s346 + $0xc8] sm:$0xff]
        %v509 = vld [vmem:[%s346 + $0xd0] sm:$0xff]
        %v510 = vld [vmem:[%s346 + $0xd8] sm:$0xff]
        %v511 = vld [vmem:[%s346 + $0xe0] sm:$0xff]
        %v512 = vld [vmem:[%s346 + $0xe8] sm:$0xff]
        %v513 = vld [vmem:[%s346 + $0xf0] sm:$0xff]
        %v514 = vld [vmem:[%s346 + $0xf8] sm:$0xff]
        %v547 = vunpack.c.l.b16 %v483
        %v548 = vunpack.c.h.b16 %v483
        %v549 = vunpack.c.l.b16 %v484
        %v550 = vunpack.c.h.b16 %v484
        %v551 = vunpack.c.l.b16 %v485
        %v552 = vunpack.c.h.b16 %v485
        %v553 = vunpack.c.l.b16 %v486
        %v554 = vunpack.c.h.b16 %v486
        %v555 = vunpack.c.l.b16 %v487
        %v556 = vunpack.c.h.b16 %v487
        %v557 = vunpack.c.l.b16 %v488
        %v558 = vunpack.c.h.b16 %v488
        %v559 = vunpack.c.l.b16 %v489
        %v560 = vunpack.c.h.b16 %v489
        %v561 = vunpack.c.l.b16 %v490
        %v562 = vunpack.c.h.b16 %v490
        %v563 = vunpack.c.l.b16 %v491
        %v564 = vunpack.c.h.b16 %v491
        %v565 = vunpack.c.l.b16 %v492
        %v566 = vunpack.c.h.b16 %v492
        %v567 = vunpack.c.l.b16 %v493
        %v568 = vunpack.c.h.b16 %v493
        %v569 = vunpack.c.l.b16 %v494
        %v570 = vunpack.c.h.b16 %v494
        %v571 = vunpack.c.l.b16 %v495
        %v572 = vunpack.c.h.b16 %v495
        %v573 = vunpack.c.l.b16 %v496
        %v574 = vunpack.c.h.b16 %v496
        %v575 = vunpack.c.l.b16 %v497
        %v576 = vunpack.c.h.b16 %v497
        %v577 = vunpack.c.l.b16 %v498
        %v578 = vunpack.c.h.b16 %v498
        %v579 = vunpack.c.l.b16 %v499
        %v580 = vunpack.c.h.b16 %v499
        %v581 = vunpack.c.l.b16 %v500
        %v582 = vunpack.c.h.b16 %v500
        %v583 = vunpack.c.l.b16 %v501
        %v584 = vunpack.c.h.b16 %v501
        %v585 = vunpack.c.l.b16 %v502
        %v586 = vunpack.c.h.b16 %v502
        %v587 = vunpack.c.l.b16 %v503
        %v588 = vunpack.c.h.b16 %v503
        %v589 = vunpack.c.l.b16 %v504
        %v590 = vunpack.c.h.b16 %v504
        %v591 = vunpack.c.l.b16 %v505
        %v592 = vunpack.c.h.b16 %v505
        %v593 = vunpack.c.l.b16 %v506
        %v594 = vunpack.c.h.b16 %v506
        %v595 = vunpack.c.l.b16 %v507
        %v596 = vunpack.c.h.b16 %v507
        %v597 = vunpack.c.l.b16 %v508
        %v598 = vunpack.c.h.b16 %v508
        %v599 = vunpack.c.l.b16 %v509
        %v600 = vunpack.c.h.b16 %v509
        %v601 = vunpack.c.l.b16 %v510
        %v602 = vunpack.c.h.b16 %v510
        %v603 = vunpack.c.l.b16 %v511
        %v604 = vunpack.c.h.b16 %v511
        %v605 = vunpack.c.l.b16 %v512
        %v606 = vunpack.c.h.b16 %v512
        %v607 = vunpack.c.l.b16 %v513
        %v608 = vunpack.c.h.b16 %v513
        %v609 = vunpack.c.l.b16 %v514
        %v610 = vunpack.c.h.b16 %v514
        %v611 = vpack.c.b16 %v549, %v547
        %v612 = vpack.c.b16 %v550, %v548
        %v613 = vpack.c.b16 %v553, %v551
        %v614 = vpack.c.b16 %v554, %v552
        %v615 = vpack.c.b16 %v557, %v555
        %v616 = vpack.c.b16 %v558, %v556
        %v617 = vpack.c.b16 %v561, %v559
        %v618 = vpack.c.b16 %v562, %v560
        %v619 = vpack.c.b16 %v565, %v563
        %v620 = vpack.c.b16 %v566, %v564
        %v621 = vpack.c.b16 %v569, %v567
        %v622 = vpack.c.b16 %v570, %v568
        %v623 = vpack.c.b16 %v573, %v571
        %v624 = vpack.c.b16 %v574, %v572
        %v625 = vpack.c.b16 %v577, %v575
        %v626 = vpack.c.b16 %v578, %v576
        %v627 = vpack.c.b16 %v581, %v579
        %v628 = vpack.c.b16 %v582, %v580
        %v629 = vpack.c.b16 %v585, %v583
        %v630 = vpack.c.b16 %v586, %v584
        %v631 = vpack.c.b16 %v589, %v587
        %v632 = vpack.c.b16 %v590, %v588
        %v633 = vpack.c.b16 %v593, %v591
        %v634 = vpack.c.b16 %v594, %v592
        %v635 = vpack.c.b16 %v597, %v595
        %v636 = vpack.c.b16 %v598, %v596
        %v637 = vpack.c.b16 %v601, %v599
        %v638 = vpack.c.b16 %v602, %v600
        %v639 = vpack.c.b16 %v605, %v603
        %v640 = vpack.c.b16 %v606, %v604
        %v641 = vpack.c.b16 %v609, %v607
        %v642 = vpack.c.b16 %v610, %v608
        %v707 = vunpack.c.l.b16 %v419
        %v708 = vunpack.c.l.b16 %v420
        %v709 = vunpack.c.l.b16 %v421
        %v710 = vunpack.c.l.b16 %v422
        %v711 = vunpack.c.l.b16 %v423
        %v712 = vunpack.c.l.b16 %v424
        %v713 = vunpack.c.l.b16 %v425
        %v714 = vunpack.c.l.b16 %v426
        %v715 = vunpack.c.l.b16 %v427
        %v716 = vunpack.c.l.b16 %v428
        %v717 = vunpack.c.l.b16 %v429
        %v718 = vunpack.c.l.b16 %v430
        %v719 = vunpack.c.l.b16 %v431
        %v720 = vunpack.c.l.b16 %v432
        %v721 = vunpack.c.l.b16 %v433
        %v722 = vunpack.c.l.b16 %v434
        %v723 = vunpack.c.l.b16 %v435
        %v724 = vunpack.c.l.b16 %v436
        %v725 = vunpack.c.l.b16 %v437
        %v726 = vunpack.c.l.b16 %v438
        %v727 = vunpack.c.l.b16 %v439
        %v728 = vunpack.c.l.b16 %v440
        %v729 = vunpack.c.l.b16 %v441
        %v730 = vunpack.c.l.b16 %v442
        %v731 = vunpack.c.l.b16 %v443
        %v732 = vunpack.c.l.b16 %v444
        %v733 = vunpack.c.l.b16 %v445
        %v734 = vunpack.c.l.b16 %v446
        %v735 = vunpack.c.l.b16 %v447
        %v736 = vunpack.c.l.b16 %v448
        %v737 = vunpack.c.l.b16 %v449
        %v738 = vunpack.c.l.b16 %v450
        %v739 = vpack.c.b16 %v708, %v707
        %v740 = vpack.c.b16 %v710, %v709
        %v741 = vpack.c.b16 %v712, %v711
        %v742 = vpack.c.b16 %v714, %v713
        %v743 = vpack.c.b16 %v716, %v715
        %v744 = vpack.c.b16 %v718, %v717
        %v745 = vpack.c.b16 %v720, %v719
        %v746 = vpack.c.b16 %v722, %v721
        %v747 = vpack.c.b16 %v724, %v723
        %v748 = vpack.c.b16 %v726, %v725
        %v749 = vpack.c.b16 %v728, %v727
        %v750 = vpack.c.b16 %v730, %v729
        %v751 = vpack.c.b16 %v732, %v731
        %v752 = vpack.c.b16 %v734, %v733
        %v753 = vpack.c.b16 %v736, %v735
        %v754 = vpack.c.b16 %v738, %v737
        %771 = vmatprep.subr.bf16.mxu0 0
        %772 = vmatpush1.bf16.msra.mxu0 %v739
        %773 = vmatprep.subr.bf16.mxu0 0
        %774 = vmatpush1.bf16.msra.mxu0 %v740
        %775 = vmatprep.subr.bf16.mxu0 0
        %776 = vmatpush1.bf16.msra.mxu0 %v741
        %777 = vmatprep.subr.bf16.mxu0 0
        %778 = vmatpush1.bf16.msra.mxu0 %v742
        %779 = vmatprep.subr.bf16.mxu0 0
        %780 = vmatpush1.bf16.msra.mxu0 %v743
        %781 = vmatprep.subr.bf16.mxu0 0
        %782 = vmatpush1.bf16.msra.mxu0 %v744
        %783 = vmatprep.subr.bf16.mxu0 0
        %784 = vmatpush1.bf16.msra.mxu0 %v745
        %785 = vmatprep.subr.bf16.mxu0 0
        %786 = vmatpush1.bf16.msra.mxu0 %v746
        %787 = vmatprep.subr.bf16.mxu0 0
        %788 = vmatpush1.bf16.msra.mxu0 %v747
        %789 = vmatprep.subr.bf16.mxu0 0
        %790 = vmatpush1.bf16.msra.mxu0 %v748
        %791 = vmatprep.subr.bf16.mxu0 0
        %792 = vmatpush1.bf16.msra.mxu0 %v749
        %793 = vmatprep.subr.bf16.mxu0 0
        %794 = vmatpush1.bf16.msra.mxu0 %v750
        %795 = vmatprep.subr.bf16.mxu0 0
        %796 = vmatpush1.bf16.msra.mxu0 %v751
        %797 = vmatprep.subr.bf16.mxu0 0
        %798 = vmatpush1.bf16.msra.mxu0 %v752
        %799 = vmatprep.subr.bf16.mxu0 0
        %800 = vmatpush1.bf16.msra.mxu0 %v753
        %801 = vmatprep.subr.bf16.mxu0 0
        %802 = vmatpush1.bf16.msra.mxu0 %v754
        %803 = vmatprep.mubr.bf16.mxu0 %v612
        %804 = vmatmul.mubr.bf16.gmra.mrb[0].mxu0 %v611
        %v805 = vpop.f32.mrb[0].mxu0
        %v806 = vadd.f32 0.0, %v805
        %v807 = vpop.f32.mrb[0].mxu0
        %v808 = vpop.f32.mrb[0].mxu0
        %v809 = vadd.f32 0.0, %v808
        %v810 = vpop.f32.mrb[0].mxu0
        %811 = vmatprep.mubr.bf16.mxu0 %v614
        %812 = vmatmul.mubr.bf16.gmra.mrb[0].mxu0 %v613
        %v813 = vpop.f32.mrb[0].mxu0
        %v814 = vadd.f32 0.0, %v813
        %v815 = vpop.f32.mrb[0].mxu0
        %v816 = vpop.f32.mrb[0].mxu0
        %v817 = vadd.f32 0.0, %v816
        %v818 = vpop.f32.mrb[0].mxu0
        %819 = vmatprep.mubr.bf16.mxu0 %v616
        %820 = vmatmul.mubr.bf16.gmra.mrb[0].mxu0 %v615
        %v821 = vpop.f32.mrb[0].mxu0
        %v822 = vadd.f32 0.0, %v821
        %v823 = vpop.f32.mrb[0].mxu0
        %v824 = vpop.f32.mrb[0].mxu0
        %v825 = vadd.f32 0.0, %v824
        %v826 = vpop.f32.mrb[0].mxu0
        %827 = vmatprep.mubr.bf16.mxu0 %v618
        %828 = vmatmul.mubr.bf16.gmra.mrb[0].mxu0 %v617
        %v829 = vpop.f32.mrb[0].mxu0
        %v830 = vadd.f32 0.0, %v829
        %v831 = vpop.f32.mrb[0].mxu0
        %v832 = vpop.f32.mrb[0].mxu0
        %v833 = vadd.f32 0.0, %v832
        %v834 = vpop.f32.mrb[0].mxu0
        %835 = vmatprep.mubr.bf16.mxu0 %v620
        %836 = vmatmul.mubr.bf16.gmra.mrb[0].mxu0 %v619
        %v837 = vpop.f32.mrb[0].mxu0
        %v838 = vadd.f32 0.0, %v837
        %v839 = vpop.f32.mrb[0].mxu0
        %v840 = vpop.f32.mrb[0].mxu0
        %v841 = vadd.f32 0.0, %v840
        %v842 = vpop.f32.mrb[0].mxu0
        %843 = vmatprep.mubr.bf16.mxu0 %v622
        %844 = vmatmul.mubr.bf16.gmra.mrb[0].mxu0 %v621
        %v845 = vpop.f32.mrb[0].mxu0
        %v846 = vadd.f32 0.0, %v845
        %v847 = vpop.f32.mrb[0].mxu0
        %v848 = vpop.f32.mrb[0].mxu0
        %v849 = vadd.f32 0.0, %v848
        %v850 = vpop.f32.mrb[0].mxu0
        %851 = vmatprep.mubr.bf16.mxu0 %v624
        %852 = vmatmul.mubr.bf16.gmra.mrb[0].mxu0 %v623
        %v853 = vpop.f32.mrb[0].mxu0
        %v854 = vadd.f32 0.0, %v853
        %v855 = vpop.f32.mrb[0].mxu0
        %v856 = vpop.f32.mrb[0].mxu0
        %v857 = vadd.f32 0.0, %v856
        %v858 = vpop.f32.mrb[0].mxu0
        %859 = vmatprep.mubr.bf16.mxu0 %v626
        %860 = vmatmul.mubr.bf16.gmra.mrb[0].mxu0 %v625
        %v861 = vpop.f32.mrb[0].mxu0
        %v862 = vadd.f32 0.0, %v861
        %v863 = vpop.f32.mrb[0].mxu0
        %v864 = vpop.f32.mrb[0].mxu0
        %v865 = vadd.f32 0.0, %v864
        %v866 = vpop.f32.mrb[0].mxu0
        %867 = vmatprep.mubr.bf16.mxu0 %v628
        %868 = vmatmul.mubr.bf16.gmra.mrb[0].mxu0 %v627
        %v869 = vpop.f32.mrb[0].mxu0
        %v870 = vadd.f32 0.0, %v869
        %v871 = vpop.f32.mrb[0].mxu0
        %v872 = vpop.f32.mrb[0].mxu0
        %v873 = vadd.f32 0.0, %v872
        %v874 = vpop.f32.mrb[0].mxu0
        %875 = vmatprep.mubr.bf16.mxu0 %v630
        %876 = vmatmul.mubr.bf16.gmra.mrb[0].mxu0 %v629
        %v877 = vpop.f32.mrb[0].mxu0
        %v878 = vadd.f32 0.0, %v877
        %v879 = vpop.f32.mrb[0].mxu0
        %v880 = vpop.f32.mrb[0].mxu0
        %v881 = vadd.f32 0.0, %v880
        %v882 = vpop.f32.mrb[0].mxu0
        %883 = vmatprep.mubr.bf16.mxu0 %v632
        %884 = vmatmul.mubr.bf16.gmra.mrb[0].mxu0 %v631
        %v885 = vpop.f32.mrb[0].mxu0
        %v886 = vadd.f32 0.0, %v885
        %v887 = vpop.f32.mrb[0].mxu0
        %v888 = vpop.f32.mrb[0].mxu0
        %v889 = vadd.f32 0.0, %v888
        %v890 = vpop.f32.mrb[0].mxu0
        %891 = vmatprep.mubr.bf16.mxu0 %v634
        %892 = vmatmul.mubr.bf16.gmra.mrb[0].mxu0 %v633
        %v893 = vpop.f32.mrb[0].mxu0
        %v894 = vadd.f32 0.0, %v893
        %v895 = vpop.f32.mrb[0].mxu0
        %v896 = vpop.f32.mrb[0].mxu0
        %v897 = vadd.f32 0.0, %v896
        %v898 = vpop.f32.mrb[0].mxu0
        %899 = vmatprep.mubr.bf16.mxu0 %v636
        %900 = vmatmul.mubr.bf16.gmra.mrb[0].mxu0 %v635
        %v901 = vpop.f32.mrb[0].mxu0
        %v902 = vadd.f32 0.0, %v901
        %v903 = vpop.f32.mrb[0].mxu0
        %v904 = vpop.f32.mrb[0].mxu0
        %v905 = vadd.f32 0.0, %v904
        %v906 = vpop.f32.mrb[0].mxu0
        %907 = vmatprep.mubr.bf16.mxu0 %v638
        %908 = vmatmul.mubr.bf16.gmra.mrb[0].mxu0 %v637
        %v909 = vpop.f32.mrb[0].mxu0
        %v910 = vadd.f32 0.0, %v909
        %v911 = vpop.f32.mrb[0].mxu0
        %v912 = vpop.f32.mrb[0].mxu0
        %v913 = vadd.f32 0.0, %v912
        %v914 = vpop.f32.mrb[0].mxu0
        %915 = vmatprep.mubr.bf16.mxu0 %v640
        %916 = vmatmul.mubr.bf16.gmra.mrb[0].mxu0 %v639
        %v917 = vpop.f32.mrb[0].mxu0
        %v918 = vadd.f32 0.0, %v917
        %v919 = vpop.f32.mrb[0].mxu0
        %v920 = vpop.f32.mrb[0].mxu0
        %v921 = vadd.f32 0.0, %v920
        %v922 = vpop.f32.mrb[0].mxu0
        %923 = vmatprep.mubr.bf16.mxu0 %v642
        %924 = vmatmul.mubr.bf16.gmra.mrb[0].mxu0 %v641
        %v925 = vpop.f32.mrb[0].mxu0
        %v926 = vadd.f32 0.0, %v925
        %v927 = vpop.f32.mrb[0].mxu0
        %v928 = vpop.f32.mrb[0].mxu0
        %v929 = vadd.f32 0.0, %v928
        %v930 = vpop.f32.mrb[0].mxu0
        %931 = vdwg.mxu0
        %v932 = vadd.f32 %v451, %v806
        %v933 = vadd.f32 %v452, %v809
        %v934 = vadd.f32 %v453, %v814
        %v935 = vadd.f32 %v454, %v817
        %v936 = vadd.f32 %v455, %v822
        %v937 = vadd.f32 %v456, %v825
        %v938 = vadd.f32 %v457, %v830
        %v939 = vadd.f32 %v458, %v833
        %v940 = vadd.f32 %v459, %v838
        %v941 = vadd.f32 %v460, %v841
        %v942 = vadd.f32 %v461, %v846
        %v943 = vadd.f32 %v462, %v849
        %v944 = vadd.f32 %v463, %v854
        %v945 = vadd.f32 %v464, %v857
        %v946 = vadd.f32 %v465, %v862
        %v947 = vadd.f32 %v466, %v865
        %v948 = vadd.f32 %v467, %v870
        %v949 = vadd.f32 %v468, %v873
        %v950 = vadd.f32 %v469, %v878
        %v951 = vadd.f32 %v470, %v881
        %v952 = vadd.f32 %v471, %v886
        %v953 = vadd.f32 %v472, %v889
        %v954 = vadd.f32 %v473, %v894
        %v955 = vadd.f32 %v474, %v897
        %v956 = vadd.f32 %v475, %v902
        %v957 = vadd.f32 %v476, %v905
        %v958 = vadd.f32 %v477, %v910
        %v959 = vadd.f32 %v478, %v913
        %v960 = vadd.f32 %v479, %v918
        %v961 = vadd.f32 %v480, %v921
        %v962 = vadd.f32 %v481, %v926
        %v963 = vadd.f32 %v482, %v929
        %964 = vst [vmem:[#allocation2] sm:$0xff] %v932
        %965 = vst [vmem:[#allocation2 + $0x8] sm:$0xff] %v933
        %966 = vst [vmem:[#allocation2 + $0x10] sm:$0xff] %v934
        %967 = vst [vmem:[#allocation2 + $0x18] sm:$0xff] %v935
        %968 = vst [vmem:[#allocation2 + $0x20] sm:$0xff] %v936
        %969 = vst [vmem:[#allocation2 + $0x28] sm:$0xff] %v937
        %970 = vst [vmem:[#allocation2 + $0x30] sm:$0xff] %v938
        %971 = vst [vmem:[#allocation2 + $0x38] sm:$0xff] %v939
        %972 = vst [vmem:[#allocation2 + $0x40] sm:$0xff] %v940
        %973 = vst [vmem:[#allocation2 + $0x48] sm:$0xff] %v941
        %974 = vst [vmem:[#allocation2 + $0x50] sm:$0xff] %v942
        %975 = vst [vmem:[#allocation2 + $0x58] sm:$0xff] %v943
        %976 = vst [vmem:[#allocation2 + $0x60] sm:$0xff] %v944
        %977 = vst [vmem:[#allocation2 + $0x68] sm:$0xff] %v945
        %978 = vst [vmem:[#allocation2 + $0x70] sm:$0xff] %v946
        %979 = vst [vmem:[#allocation2 + $0x78] sm:$0xff] %v947
        %980 = vst [vmem:[#allocation2 + $0x80] sm:$0xff] %v948
        %981 = vst [vmem:[#allocation2 + $0x88] sm:$0xff] %v949
        %982 = vst [vmem:[#allocation2 + $0x90] sm:$0xff] %v950
        %983 = vst [vmem:[#allocation2 + $0x98] sm:$0xff] %v951
        %984 = vst [vmem:[#allocation2 + $0xa0] sm:$0xff] %v952
        %985 = vst [vmem:[#allocation2 + $0xa8] sm:$0xff] %v953
        %986 = vst [vmem:[#allocation2 + $0xb0] sm:$0xff] %v954
        %987 = vst [vmem:[#allocation2 + $0xb8] sm:$0xff] %v955
        %988 = vst [vmem:[#allocation2 + $0xc0] sm:$0xff] %v956
        %989 = vst [vmem:[#allocation2 + $0xc8] sm:$0xff] %v957
        %990 = vst [vmem:[#allocation2 + $0xd0] sm:$0xff] %v958
        %991 = vst [vmem:[#allocation2 + $0xd8] sm:$0xff] %v959
        %992 = vst [vmem:[#allocation2 + $0xe0] sm:$0xff] %v960
        %993 = vst [vmem:[#allocation2 + $0xe8] sm:$0xff] %v961
        %994 = vst [vmem:[#allocation2 + $0xf0] sm:$0xff] %v962
        %995 = vst [vmem:[#allocation2 + $0xf8] sm:$0xff] %v963
        %p996 = scmp.eq.s32.totalorder %s20, 2
        // Predicated region
        $region79: #{resgcn_forward.3} parent=69 // pred_check
          %p997 = pneg %p996
        $region80: #{resgcn_forward.3} parent=69 // pred_check_branch
          %999 = sbr.rel (%p997) target = $region82
        $region81: #{resgcn_forward.3} parent=69 // pred_region
          %v1000 = vld [vmem:[#allocation2] sm:$0xff]
          %v1001 = vld [vmem:[#allocation2 + $0x8] sm:$0xff]
          %v1002 = vld [vmem:[#allocation2 + $0x10] sm:$0xff]
          %v1003 = vld [vmem:[#allocation2 + $0x18] sm:$0xff]
          %v1004 = vld [vmem:[#allocation2 + $0x20] sm:$0xff]
          %v1005 = vld [vmem:[#allocation2 + $0x28] sm:$0xff]
          %v1006 = vld [vmem:[#allocation2 + $0x30] sm:$0xff]
          %v1007 = vld [vmem:[#allocation2 + $0x38] sm:$0xff]
          %v1008 = vld [vmem:[#allocation2 + $0x40] sm:$0xff]
          %v1009 = vld [vmem:[#allocation2 + $0x48] sm:$0xff]
          %v1010 = vld [vmem:[#allocation2 + $0x50] sm:$0xff]
          %v1011 = vld [vmem:[#allocation2 + $0x58] sm:$0xff]
          %v1012 = vld [vmem:[#allocation2 + $0x60] sm:$0xff]
          %v1013 = vld [vmem:[#allocation2 + $0x68] sm:$0xff]
          %v1014 = vld [vmem:[#allocation2 + $0x70] sm:$0xff]
          %v1015 = vld [vmem:[#allocation2 + $0x78] sm:$0xff]
          %v1016 = vld [vmem:[#allocation2 + $0x80] sm:$0xff]
          %v1017 = vld [vmem:[#allocation2 + $0x88] sm:$0xff]
          %v1018 = vld [vmem:[#allocation2 + $0x90] sm:$0xff]
          %v1019 = vld [vmem:[#allocation2 + $0x98] sm:$0xff]
          %v1020 = vld [vmem:[#allocation2 + $0xa0] sm:$0xff]
          %v1021 = vld [vmem:[#allocation2 + $0xa8] sm:$0xff]
          %v1022 = vld [vmem:[#allocation2 + $0xb0] sm:$0xff]
          %v1023 = vld [vmem:[#allocation2 + $0xb8] sm:$0xff]
          %v1024 = vld [vmem:[#allocation2 + $0xc0] sm:$0xff]
          %v1025 = vld [vmem:[#allocation2 + $0xc8] sm:$0xff]
          %v1026 = vld [vmem:[#allocation2 + $0xd0] sm:$0xff]
          %v1027 = vld [vmem:[#allocation2 + $0xd8] sm:$0xff]
          %v1028 = vld [vmem:[#allocation2 + $0xe0] sm:$0xff]
          %v1029 = vld [vmem:[#allocation2 + $0xe8] sm:$0xff]
          %v1030 = vld [vmem:[#allocation2 + $0xf0] sm:$0xff]
          %v1031 = vld [vmem:[#allocation2 + $0xf8] sm:$0xff]
          %v1032 = vpack.c.bf16 %v1001, %v1000
          %v1033 = vpack.c.bf16 %v1003, %v1002
          %v1034 = vpack.c.bf16 %v1005, %v1004
          %v1035 = vpack.c.bf16 %v1007, %v1006
          %v1036 = vpack.c.bf16 %v1009, %v1008
          %v1037 = vpack.c.bf16 %v1011, %v1010
          %v1038 = vpack.c.bf16 %v1013, %v1012
          %v1039 = vpack.c.bf16 %v1015, %v1014
          %v1040 = vpack.c.bf16 %v1017, %v1016
          %v1041 = vpack.c.bf16 %v1019, %v1018
          %v1042 = vpack.c.bf16 %v1021, %v1020
          %v1043 = vpack.c.bf16 %v1023, %v1022
          %v1044 = vpack.c.bf16 %v1025, %v1024
          %v1045 = vpack.c.bf16 %v1027, %v1026
          %v1046 = vpack.c.bf16 %v1029, %v1028
          %v1047 = vpack.c.bf16 %v1031, %v1030
          %v1048 = vld [vmem:[%s2] sm:$0xf]
          %v1049 = vld [vmem:[%s2 + $0x4] sm:$0xf]
          %v1050 = vld [vmem:[%s2 + $0x8] sm:$0xf]
          %v1051 = vld [vmem:[%s2 + $0xc] sm:$0xf]
          %v1052 = vld [vmem:[%s2 + $0x10] sm:$0xf]
          %v1053 = vld [vmem:[%s2 + $0x14] sm:$0xf]
          %v1054 = vld [vmem:[%s2 + $0x18] sm:$0xf]
          %v1055 = vld [vmem:[%s2 + $0x1c] sm:$0xf]
          %v1056 = vld [vmem:[%s2 + $0x20] sm:$0xf]
          %v1057 = vld [vmem:[%s2 + $0x24] sm:$0xf]
          %v1058 = vld [vmem:[%s2 + $0x28] sm:$0xf]
          %v1059 = vld [vmem:[%s2 + $0x2c] sm:$0xf]
          %v1060 = vld [vmem:[%s2 + $0x30] sm:$0xf]
          %v1061 = vld [vmem:[%s2 + $0x34] sm:$0xf]
          %v1062 = vld [vmem:[%s2 + $0x38] sm:$0xf]
          %v1063 = vld [vmem:[%s2 + $0x3c] sm:$0xf]
          %v1064 = vld [vmem:[%s3] sm:$0x1]
          %v1066 = vlaneseq
          %v1067 = vshrl.u32 %v1066, 7
          %v1068 = vsub.s32 0, %v1067
          %v1069 = vrot.slane %v1064, %v1068
          %v1087 = vunpack.c.l.b16 %v1048
          %v1088 = vunpack.c.l.b16 %v1049
          %v1089 = vunpack.c.l.b16 %v1050
          %v1090 = vunpack.c.l.b16 %v1051
          %v1091 = vunpack.c.l.b16 %v1052
          %v1092 = vunpack.c.l.b16 %v1053
          %v1093 = vunpack.c.l.b16 %v1054
          %v1094 = vunpack.c.l.b16 %v1055
          %v1095 = vunpack.c.l.b16 %v1056
          %v1096 = vunpack.c.l.b16 %v1057
          %v1097 = vunpack.c.l.b16 %v1058
          %v1098 = vunpack.c.l.b16 %v1059
          %v1099 = vunpack.c.l.b16 %v1060
          %v1100 = vunpack.c.l.b16 %v1061
          %v1101 = vunpack.c.l.b16 %v1062
          %v1102 = vunpack.c.l.b16 %v1063
          %v1103 = vpack.c.b16 %v1088, %v1087
          %v1104 = vpack.c.b16 %v1090, %v1089
          %v1105 = vpack.c.b16 %v1092, %v1091
          %v1106 = vpack.c.b16 %v1094, %v1093
          %v1107 = vpack.c.b16 %v1096, %v1095
          %v1108 = vpack.c.b16 %v1098, %v1097
          %v1109 = vpack.c.b16 %v1100, %v1099
          %v1110 = vpack.c.b16 %v1102, %v1101
          %1119 = vmatprep.subr.bf16.mxu0 0
          %1120 = vmatpush1.bf16.msra.mxu0 %v1103
          %1121 = vmatprep.subr.bf16.mxu0 0
          %1122 = vmatpush1.bf16.msra.mxu0 %v1104
          %1123 = vmatprep.subr.bf16.mxu0 0
          %1124 = vmatpush1.bf16.msra.mxu0 %v1105
          %1125 = vmatprep.subr.bf16.mxu0 0
          %1126 = vmatpush1.bf16.msra.mxu0 %v1106
          %1127 = vmatprep.subr.bf16.mxu0 0
          %1128 = vmatpush1.bf16.msra.mxu0 %v1107
          %1129 = vmatprep.subr.bf16.mxu0 0
          %1130 = vmatpush1.bf16.msra.mxu0 %v1108
          %1131 = vmatprep.subr.bf16.mxu0 0
          %1132 = vmatpush1.bf16.msra.mxu0 %v1109
          %1133 = vmatprep.subr.bf16.mxu0 0
          %1134 = vmatpush1.bf16.msra.mxu0 %v1110
          %1135 = vmatprep.subr.bf16.mxu0 0
          %1136 = vmatpush1.bf16.msra.mxu0 0
          %1137 = vmatprep.subr.bf16.mxu0 0
          %1138 = vmatpush1.bf16.msra.mxu0 0
          %1139 = vmatprep.subr.bf16.mxu0 0
          %1140 = vmatpush1.bf16.msra.mxu0 0
          %1141 = vmatprep.subr.bf16.mxu0 0
          %1142 = vmatpush1.bf16.msra.mxu0 0
          %1143 = vmatprep.subr.bf16.mxu0 0
          %1144 = vmatpush1.bf16.msra.mxu0 0
          %1145 = vmatprep.subr.bf16.mxu0 0
          %1146 = vmatpush1.bf16.msra.mxu0 0
          %1147 = vmatprep.subr.bf16.mxu0 0
          %1148 = vmatpush1.bf16.msra.mxu0 0
          %1149 = vmatprep.subr.bf16.mxu0 0
          %1150 = vmatpush1.bf16.msra.mxu0 0
          %1151 = vmatprep.mubr.bf16.mxu0 0
          %1152 = vmatmul.mubr.bf16.gmra.mrb[0].mxu0 %v1032
          %v1153 = vpop.f32.mrb[0].mxu0
          %v1154 = vadd.f32 %v1069, %v1153
          %v1155 = vpop.f32.mrb[0].mxu0
          %v1156 = vpop.f32.mrb[0].mxu0
          %v1157 = vadd.f32 %v1069, %v1156
          %v1158 = vpop.f32.mrb[0].mxu0
          %1159 = vmatprep.mubr.bf16.mxu0 0
          %1160 = vmatmul.mubr.bf16.gmra.mrb[0].mxu0 %v1033
          %v1161 = vpop.f32.mrb[0].mxu0
          %v1162 = vadd.f32 %v1069, %v1161
          %v1163 = vpop.f32.mrb[0].mxu0
          %v1164 = vpop.f32.mrb[0].mxu0
          %v1165 = vadd.f32 %v1069, %v1164
          %v1166 = vpop.f32.mrb[0].mxu0
          %1167 = vmatprep.mubr.bf16.mxu0 0
          %1168 = vmatmul.mubr.bf16.gmra.mrb[0].mxu0 %v1034
          %v1169 = vpop.f32.mrb[0].mxu0
          %v1170 = vadd.f32 %v1069, %v1169
          %v1171 = vpop.f32.mrb[0].mxu0
          %v1172 = vpop.f32.mrb[0].mxu0
          %v1173 = vadd.f32 %v1069, %v1172
          %v1174 = vpop.f32.mrb[0].mxu0
          %1175 = vmatprep.mubr.bf16.mxu0 0
          %1176 = vmatmul.mubr.bf16.gmra.mrb[0].mxu0 %v1035
          %v1177 = vpop.f32.mrb[0].mxu0
          %v1178 = vadd.f32 %v1069, %v1177
          %v1179 = vpop.f32.mrb[0].mxu0
          %v1180 = vpop.f32.mrb[0].mxu0
          %v1181 = vadd.f32 %v1069, %v1180
          %v1182 = vpop.f32.mrb[0].mxu0
          %1183 = vmatprep.mubr.bf16.mxu0 0
          %1184 = vmatmul.mubr.bf16.gmra.mrb[0].mxu0 %v1036
          %v1185 = vpop.f32.mrb[0].mxu0
          %v1186 = vadd.f32 %v1069, %v1185
          %v1187 = vpop.f32.mrb[0].mxu0
          %v1188 = vpop.f32.mrb[0].mxu0
          %v1189 = vadd.f32 %v1069, %v1188
          %v1190 = vpop.f32.mrb[0].mxu0
          %1191 = vmatprep.mubr.bf16.mxu0 0
          %1192 = vmatmul.mubr.bf16.gmra.mrb[0].mxu0 %v1037
          %v1193 = vpop.f32.mrb[0].mxu0
          %v1194 = vadd.f32 %v1069, %v1193
          %v1195 = vpop.f32.mrb[0].mxu0
          %v1196 = vpop.f32.mrb[0].mxu0
          %v1197 = vadd.f32 %v1069, %v1196
          %v1198 = vpop.f32.mrb[0].mxu0
          %1199 = vmatprep.mubr.bf16.mxu0 0
          %1200 = vmatmul.mubr.bf16.gmra.mrb[0].mxu0 %v1038
          %v1201 = vpop.f32.mrb[0].mxu0
          %v1202 = vadd.f32 %v1069, %v1201
          %v1203 = vpop.f32.mrb[0].mxu0
          %v1204 = vpop.f32.mrb[0].mxu0
          %v1205 = vadd.f32 %v1069, %v1204
          %v1206 = vpop.f32.mrb[0].mxu0
          %1207 = vmatprep.mubr.bf16.mxu0 0
          %1208 = vmatmul.mubr.bf16.gmra.mrb[0].mxu0 %v1039
          %v1209 = vpop.f32.mrb[0].mxu0
          %v1210 = vadd.f32 %v1069, %v1209
          %v1211 = vpop.f32.mrb[0].mxu0
          %v1212 = vpop.f32.mrb[0].mxu0
          %v1213 = vadd.f32 %v1069, %v1212
          %v1214 = vpop.f32.mrb[0].mxu0
          %1215 = vmatprep.mubr.bf16.mxu0 0
          %1216 = vmatmul.mubr.bf16.gmra.mrb[0].mxu0 %v1040
          %v1217 = vpop.f32.mrb[0].mxu0
          %v1218 = vadd.f32 %v1069, %v1217
          %v1219 = vpop.f32.mrb[0].mxu0
          %v1220 = vpop.f32.mrb[0].mxu0
          %v1221 = vadd.f32 %v1069, %v1220
          %v1222 = vpop.f32.mrb[0].mxu0
          %1223 = vmatprep.mubr.bf16.mxu0 0
          %1224 = vmatmul.mubr.bf16.gmra.mrb[0].mxu0 %v1041
          %v1225 = vpop.f32.mrb[0].mxu0
          %v1226 = vadd.f32 %v1069, %v1225
          %v1227 = vpop.f32.mrb[0].mxu0
          %v1228 = vpop.f32.mrb[0].mxu0
          %v1229 = vadd.f32 %v1069, %v1228
          %v1230 = vpop.f32.mrb[0].mxu0
          %1231 = vmatprep.mubr.bf16.mxu0 0
          %1232 = vmatmul.mubr.bf16.gmra.mrb[0].mxu0 %v1042
          %v1233 = vpop.f32.mrb[0].mxu0
          %v1234 = vadd.f32 %v1069, %v1233
          %v1235 = vpop.f32.mrb[0].mxu0
          %v1236 = vpop.f32.mrb[0].mxu0
          %v1237 = vadd.f32 %v1069, %v1236
          %v1238 = vpop.f32.mrb[0].mxu0
          %1239 = vmatprep.mubr.bf16.mxu0 0
          %1240 = vmatmul.mubr.bf16.gmra.mrb[0].mxu0 %v1043
          %v1241 = vpop.f32.mrb[0].mxu0
          %v1242 = vadd.f32 %v1069, %v1241
          %v1243 = vpop.f32.mrb[0].mxu0
          %v1244 = vpop.f32.mrb[0].mxu0
          %v1245 = vadd.f32 %v1069, %v1244
          %v1246 = vpop.f32.mrb[0].mxu0
          %1247 = vmatprep.mubr.bf16.mxu0 0
          %1248 = vmatmul.mubr.bf16.gmra.mrb[0].mxu0 %v1044
          %v1249 = vpop.f32.mrb[0].mxu0
          %v1250 = vadd.f32 %v1069, %v1249
          %v1251 = vpop.f32.mrb[0].mxu0
          %v1252 = vpop.f32.mrb[0].mxu0
          %v1253 = vadd.f32 %v1069, %v1252
          %v1254 = vpop.f32.mrb[0].mxu0
          %1255 = vmatprep.mubr.bf16.mxu0 0
          %1256 = vmatmul.mubr.bf16.gmra.mrb[0].mxu0 %v1045
          %v1257 = vpop.f32.mrb[0].mxu0
          %v1258 = vadd.f32 %v1069, %v1257
          %v1259 = vpop.f32.mrb[0].mxu0
          %v1260 = vpop.f32.mrb[0].mxu0
          %v1261 = vadd.f32 %v1069, %v1260
          %v1262 = vpop.f32.mrb[0].mxu0
          %1263 = vmatprep.mubr.bf16.mxu0 0
          %1264 = vmatmul.mubr.bf16.gmra.mrb[0].mxu0 %v1046
          %v1265 = vpop.f32.mrb[0].mxu0
          %v1266 = vadd.f32 %v1069, %v1265
          %v1267 = vpop.f32.mrb[0].mxu0
          %v1268 = vpop.f32.mrb[0].mxu0
          %v1269 = vadd.f32 %v1069, %v1268
          %v1270 = vpop.f32.mrb[0].mxu0
          %1271 = vmatprep.mubr.bf16.mxu0 0
          %1272 = vmatmul.mubr.bf16.gmra.mrb[0].mxu0 %v1047
          %v1273 = vpop.f32.mrb[0].mxu0
          %v1274 = vadd.f32 %v1069, %v1273
          %v1275 = vpop.f32.mrb[0].mxu0
          %v1276 = vpop.f32.mrb[0].mxu0
          %v1277 = vadd.f32 %v1069, %v1276
          %v1278 = vpop.f32.mrb[0].mxu0
          %1279 = vdwg.mxu0
          %v1280 = vmax.f32 %v1154, 0.0
          %v1281 = vmax.f32 %v1157, 0.0
          %v1282 = vmax.f32 %v1162, 0.0
          %v1283 = vmax.f32 %v1165, 0.0
          %v1284 = vmax.f32 %v1170, 0.0
          %v1285 = vmax.f32 %v1173, 0.0
          %v1286 = vmax.f32 %v1178, 0.0
          %v1287 = vmax.f32 %v1181, 0.0
          %v1288 = vmax.f32 %v1186, 0.0
          %v1289 = vmax.f32 %v1189, 0.0
          %v1290 = vmax.f32 %v1194, 0.0
          %v1291 = vmax.f32 %v1197, 0.0
          %v1292 = vmax.f32 %v1202, 0.0
          %v1293 = vmax.f32 %v1205, 0.0
          %v1294 = vmax.f32 %v1210, 0.0
          %v1295 = vmax.f32 %v1213, 0.0
          %v1296 = vmax.f32 %v1218, 0.0
          %v1297 = vmax.f32 %v1221, 0.0
          %v1298 = vmax.f32 %v1226, 0.0
          %v1299 = vmax.f32 %v1229, 0.0
          %v1300 = vmax.f32 %v1234, 0.0
          %v1301 = vmax.f32 %v1237, 0.0
          %v1302 = vmax.f32 %v1242, 0.0
          %v1303 = vmax.f32 %v1245, 0.0
          %v1304 = vmax.f32 %v1250, 0.0
          %v1305 = vmax.f32 %v1253, 0.0
          %v1306 = vmax.f32 %v1258, 0.0
          %v1307 = vmax.f32 %v1261, 0.0
          %v1308 = vmax.f32 %v1266, 0.0
          %v1309 = vmax.f32 %v1269, 0.0
          %v1310 = vmax.f32 %v1274, 0.0
          %v1311 = vmax.f32 %v1277, 0.0
          %v1312 = vpack.c.bf16 %v1281, %v1280
          %v1313 = vpack.c.bf16 %v1283, %v1282
          %v1314 = vpack.c.bf16 %v1285, %v1284
          %v1315 = vpack.c.bf16 %v1287, %v1286
          %v1316 = vpack.c.bf16 %v1289, %v1288
          %v1317 = vpack.c.bf16 %v1291, %v1290
          %v1318 = vpack.c.bf16 %v1293, %v1292
          %v1319 = vpack.c.bf16 %v1295, %v1294
          %v1320 = vpack.c.bf16 %v1297, %v1296
          %v1321 = vpack.c.bf16 %v1299, %v1298
          %v1322 = vpack.c.bf16 %v1301, %v1300
          %v1323 = vpack.c.bf16 %v1303, %v1302
          %v1324 = vpack.c.bf16 %v1305, %v1304
          %v1325 = vpack.c.bf16 %v1307, %v1306
          %v1326 = vpack.c.bf16 %v1309, %v1308
          %v1327 = vpack.c.bf16 %v1311, %v1310
          %v1344 = vunpack.c.l.b16 %v1312
          %v1345 = vunpack.c.h.b16 %v1312
          %v1346 = vunpack.c.l.b16 %v1313
          %v1347 = vunpack.c.h.b16 %v1313
          %v1348 = vunpack.c.l.b16 %v1314
          %v1349 = vunpack.c.h.b16 %v1314
          %v1350 = vunpack.c.l.b16 %v1315
          %v1351 = vunpack.c.h.b16 %v1315
          %v1352 = vunpack.c.l.b16 %v1316
          %v1353 = vunpack.c.h.b16 %v1316
          %v1354 = vunpack.c.l.b16 %v1317
          %v1355 = vunpack.c.h.b16 %v1317
          %v1356 = vunpack.c.l.b16 %v1318
          %v1357 = vunpack.c.h.b16 %v1318
          %v1358 = vunpack.c.l.b16 %v1319
          %v1359 = vunpack.c.h.b16 %v1319
          %v1360 = vunpack.c.l.b16 %v1320
          %v1361 = vunpack.c.h.b16 %v1320
          %v1362 = vunpack.c.l.b16 %v1321
          %v1363 = vunpack.c.h.b16 %v1321
          %v1364 = vunpack.c.l.b16 %v1322
          %v1365 = vunpack.c.h.b16 %v1322
          %v1366 = vunpack.c.l.b16 %v1323
          %v1367 = vunpack.c.h.b16 %v1323
          %v1368 = vunpack.c.l.b16 %v1324
          %v1369 = vunpack.c.h.b16 %v1324
          %v1370 = vunpack.c.l.b16 %v1325
          %v1371 = vunpack.c.h.b16 %v1325
          %v1372 = vunpack.c.l.b16 %v1326
          %v1373 = vunpack.c.h.b16 %v1326
          %v1374 = vunpack.c.l.b16 %v1327
          %v1375 = vunpack.c.h.b16 %v1327
          %v1376 = vpack.c.b16 %v1344, %v1344
          %v1377 = vpack.c.b16 %v1345, %v1345
          %v1378 = vpack.c.b16 %v1346, %v1346
          %v1379 = vpack.c.b16 %v1347, %v1347
          %v1380 = vpack.c.b16 %v1348, %v1348
          %v1381 = vpack.c.b16 %v1349, %v1349
          %v1382 = vpack.c.b16 %v1350, %v1350
          %v1383 = vpack.c.b16 %v1351, %v1351
          %v1384 = vpack.c.b16 %v1352, %v1352
          %v1385 = vpack.c.b16 %v1353, %v1353
          %v1386 = vpack.c.b16 %v1354, %v1354
          %v1387 = vpack.c.b16 %v1355, %v1355
          %v1388 = vpack.c.b16 %v1356, %v1356
          %v1389 = vpack.c.b16 %v1357, %v1357
          %v1390 = vpack.c.b16 %v1358, %v1358
          %v1391 = vpack.c.b16 %v1359, %v1359
          %v1392 = vpack.c.b16 %v1360, %v1360
          %v1393 = vpack.c.b16 %v1361, %v1361
          %v1394 = vpack.c.b16 %v1362, %v1362
          %v1395 = vpack.c.b16 %v1363, %v1363
          %v1396 = vpack.c.b16 %v1364, %v1364
          %v1397 = vpack.c.b16 %v1365, %v1365
          %v1398 = vpack.c.b16 %v1366, %v1366
          %v1399 = vpack.c.b16 %v1367, %v1367
          %v1400 = vpack.c.b16 %v1368, %v1368
          %v1401 = vpack.c.b16 %v1369, %v1369
          %v1402 = vpack.c.b16 %v1370, %v1370
          %v1403 = vpack.c.b16 %v1371, %v1371
          %v1404 = vpack.c.b16 %v1372, %v1372
          %v1405 = vpack.c.b16 %v1373, %v1373
          %v1406 = vpack.c.b16 %v1374, %v1374
          %v1407 = vpack.c.b16 %v1375, %v1375
          %1440 = vst [vmem:[%s375] sm:$0xf] %v1376
          %1441 = vst [vmem:[%s375 + $0x4] sm:$0xf] %v1377
          %1442 = vst [vmem:[%s375 + $0x8] sm:$0xf] %v1378
          %1443 = vst [vmem:[%s375 + $0xc] sm:$0xf] %v1379
          %1444 = vst [vmem:[%s375 + $0x10] sm:$0xf] %v1380
          %1445 = vst [vmem:[%s375 + $0x14] sm:$0xf] %v1381
          %1446 = vst [vmem:[%s375 + $0x18] sm:$0xf] %v1382
          %1447 = vst [vmem:[%s375 + $0x1c] sm:$0xf] %v1383
          %1448 = vst [vmem:[%s375 + $0x20] sm:$0xf] %v1384
          %1449 = vst [vmem:[%s375 + $0x24] sm:$0xf] %v1385
          %1450 = vst [vmem:[%s375 + $0x28] sm:$0xf] %v1386
          %1451 = vst [vmem:[%s375 + $0x2c] sm:$0xf] %v1387
          %1452 = vst [vmem:[%s375 + $0x30] sm:$0xf] %v1388
          %1453 = vst [vmem:[%s375 + $0x34] sm:$0xf] %v1389
          %1454 = vst [vmem:[%s375 + $0x38] sm:$0xf] %v1390
          %1455 = vst [vmem:[%s375 + $0x3c] sm:$0xf] %v1391
          %1456 = vst [vmem:[%s375 + $0x40] sm:$0xf] %v1392
          %1457 = vst [vmem:[%s375 + $0x44] sm:$0xf] %v1393
          %1458 = vst [vmem:[%s375 + $0x48] sm:$0xf] %v1394
          %1459 = vst [vmem:[%s375 + $0x4c] sm:$0xf] %v1395
          %1460 = vst [vmem:[%s375 + $0x50] sm:$0xf] %v1396
          %1461 = vst [vmem:[%s375 + $0x54] sm:$0xf] %v1397
          %1462 = vst [vmem:[%s375 + $0x58] sm:$0xf] %v1398
          %1463 = vst [vmem:[%s375 + $0x5c] sm:$0xf] %v1399
          %1464 = vst [vmem:[%s375 + $0x60] sm:$0xf] %v1400
          %1465 = vst [vmem:[%s375 + $0x64] sm:$0xf] %v1401
          %1466 = vst [vmem:[%s375 + $0x68] sm:$0xf] %v1402
          %1467 = vst [vmem:[%s375 + $0x6c] sm:$0xf] %v1403
          %1468 = vst [vmem:[%s375 + $0x70] sm:$0xf] %v1404
          %1469 = vst [vmem:[%s375 + $0x74] sm:$0xf] %v1405
          %1470 = vst [vmem:[%s375 + $0x78] sm:$0xf] %v1406
          %1471 = vst [vmem:[%s375 + $0x7c] sm:$0xf] %v1407
        $region82: #{resgcn_forward.3} parent=69 // pred_fallthru
          _
        %s1472 = smul.u32 32, %s19
        %p1473 = scmp.lt.s32.totalorder %s1472, 95
        %s1474 = scalar_select %p1473, %s1472, 95
        %s1475 = smul.addr %s1474, 4
        %s1476 = scalar_lea.vmem %s4, %s1475
        // Predicated region
        $region83: #{resgcn_forward.3} parent=69 // pred_check
          %p1477 = pneg %p136
        $region84: #{resgcn_forward.3} parent=69 // pred_check_branch
          %1479 = sbr.rel (%p1477) target = $region86
        $region85: #{resgcn_forward.3} parent=69 // pred_region
          %s1480 = smul.u32 32, %s19
        $region86: #{resgcn_forward.3} parent=69 // pred_fallthru
          _
      $region70: #{resgcn_forward.3} parent=5 // pred_fallthru
        _
      %p1481 = scmp.le.s32.totalorder 2, %s10
      // Predicated region
      $region87: #{resgcn_forward.3} parent=5 // pred_check
        %p1482 = pneg %p1481
      $region88: #{resgcn_forward.3} parent=5 // pred_check_branch
        %1484 = sbr.rel (%p1482) target = $region90
      $region89: #{resgcn_forward.3} parent=5 // pred_region
        %s1485 = ssub.s32 %s10, 2
        // Predicated region
        $region91: #{resgcn_forward.3} parent=89 // pred_check
          %p1486 = pneg %p142
        $region92: #{resgcn_forward.3} parent=89 // pred_check_branch
          %1488 = sbr.rel (%p1486) target = $region94
        $region93: #{resgcn_forward.3} parent=89 // pred_region
          %s1489 = smul.u32 32, %s21
          %p1490 = scmp.lt.s32.totalorder %s1489, 95
          %s1491 = scalar_select %p1490, %s1489, 95
          %s1492 = smul.addr %s1491, 4
          %s1493 = scalar_lea.vmem %s4, %s1492
        $region94: #{resgcn_forward.3} parent=89 // pred_fallthru
          _
      $region90: #{resgcn_forward.3} parent=5 // pred_fallthru
        _
    $region6: #{resgcn_forward.3} parent=1 // loop_footer
      %s14 = sadd.s32 1, %s10
    $region7: #{resgcn_forward.3} parent=1 // loop_footer_branch
      %9 = sbr.rel target = $region3
    $region8: #{resgcn_forward.3} parent=1 // loop_exit
      _

// kernel: resgcn_forward.2
$region0: #{resgcn_forward.2}
  #allocation0 [shape = 'u32[]', space=smem, size = 0x4, offset = 0x4, fixed_abs, tag = 'smem constant byte address 0x4 - core index']
  #allocation1 [shape = 'u32[144,128]{1,0:T(1,128)}', space=vmem, size = 0x12000, scoped, tag = 'internal scratch']
  #allocation2 [shape = 'f32[256,128]{1,0:T(8,128)}', space=vmem, size = 0x20000, scoped, tag = 'scratch operand']
  %s0 = inlined_call_operand.hbm [shape: bf16[768,768], index: 0, kind: input, shape index: {}]
  %s1 = inlined_call_operand.vmem [shape: bf16[768,128], index: 1, kind: input, shape index: {}]
  %s2 = inlined_call_operand.vmem [shape: bf16[128,128], index: 2, kind: input, shape index: {}]
  %s3 = inlined_call_operand.vmem [shape: f32[1,128], index: 3, kind: input, shape index: {}]
  %s4 = inlined_call_operand.vmem [shape: bf16[768,128], index: 4, kind: output, shape index: {}]
  %s5 = sld [smem:[#allocation0]]
  $region61: #{resgcn_forward.2} parent=0
    _
  %s7 = ssub.s32 1, %s5
  %s8 = scalar_select 0, %s7, %s5
  $region1: #{resgcn_forward.2} parent=0
    #allocation3 [shape = 'u8[262144]{0}', space=vmem, size = 0x40000, scoped, tag = 'input window, operand 0']
    #allocation4 [shape = 's32[2]{0}', space=sflag, size = 0x8, scoped, tag = 'scoped memory for resgcn_forward.2']
    %9 = vsyncpa [#allocation4], 0
    %s10 = scalar_lea.sflag [#allocation4], 1
    %11 = vsyncpa %s10, 0
    loop: start=0, step=1, limit=11
    $region2: #{resgcn_forward.2} parent=1 // loop_pre_header
      _
    $region3: #{resgcn_forward.2} parent=1 // loop_header
      %s13 = sphi 0, %s17
      %p14 = scmp.ge.s32.totalorder %s13, 11
      %s20 = sphi 0, %s32
      %s21 = sphi 0, %s28
      %s22 = sphi 0, %s20
      %s23 = sphi 0, %s21
      %s24 = sphi 0, %s22
      %s25 = sphi 0, %s23
      %s37 = sphi 0, %s39
      %s40 = sphi 0, %s37
      %s41 = sphi 0, %s40
      %s57 = sphi 0, %s41
      %s61 = sphi 0, %s61
      %s63 = sphi 0, %s61
      %s64 = sphi 0, %s63
      %s78 = sphi 0, %s64
      %s82 = sphi 0, %s82
      %s84 = sphi 0, %s82
      %s85 = sphi 0, %s84
      %s99 = sphi 0, %s85
      %s103 = sphi 0, %s103
      %s105 = sphi 0, %s103
      %s106 = sphi 0, %s105
      %s120 = sphi 0, %s106
      %s126 = sphi 0, %s128
      %s129 = sphi 0, %s126
      %s130 = sphi 0, %s129
      %s146 = sphi 0, %s130
    $region4: #{resgcn_forward.2} parent=1 // loop_header_branch
      %16 = sbr.rel (%p14) target = $region8
    $region5: #{resgcn_forward.2} parent=1 // loop_body
      %s18 = ssub.s32 %s13, 1
      %s19 = ssub.s32 %s13, 2
      %s26 = sadd.s32 1, %s21
      %p27 = scmp.ge.s32.totalorder %s26, 3
      %s28 = scalar_select %p27, 0, %s26
      %s29 = sadd.s32 1, %s20
      %s30 = scalar_select %p27, %s29, %s20
      %p31 = scmp.ge.s32.totalorder %s30, 3
      %s32 = scalar_select %p31, 0, %s30
      %s33 = ssub.s32 %s20, %s32
      %s34 = ssub.s32 %s21, %s28
      %s35 = sor.u32 %s33, %s34
      %p36 = scmp.eq.s32.totalorder %s35, 0
      %s38 = sadd.s32 %s37, 1
      %s39 = scalar_select %p36, %s37, %s38
      %p42 = pneg %p36
      %p43 = scmp.eq.s32.totalorder %s13, 8
      %p44 = por %p42, %p43
      %p45 = scmp.ne.s32.totalorder %s37, %s40
      %p46 = scmp.eq.s32.totalorder %s13, 0
      %p47 = por %p45, %p46
      %p48 = scmp.ne.s32.totalorder %s37, %s40
      %p49 = scmp.eq.s32.totalorder %s18, 8
      %p50 = por %p48, %p49
      %p51 = scmp.ne.s32.totalorder %s40, %s41
      %p52 = scmp.eq.s32.totalorder %s18, 0
      %p53 = por %p51, %p52
      %p54 = scmp.ne.s32.totalorder %s40, %s41
      %p55 = scmp.eq.s32.totalorder %s19, 8
      %p56 = por %p54, %p55
      %p58 = scmp.ne.s32.totalorder %s41, %s57
      %p59 = scmp.eq.s32.totalorder %s19, 0
      %p60 = por %p58, %p59
      %s62 = sadd.s32 %s61, 1
      %p65 = scmp.eq.s32.totalorder %s13, 8
      %p66 = scmp.ne.s32.totalorder %s61, %s63
      %p67 = scmp.eq.s32.totalorder %s13, 0
      %p68 = por %p66, %p67
      %p69 = scmp.ne.s32.totalorder %s61, %s63
      %p70 = scmp.eq.s32.totalorder %s18, 8
      %p71 = por %p69, %p70
      %p72 = scmp.ne.s32.totalorder %s63, %s64
      %p73 = scmp.eq.s32.totalorder %s18, 0
      %p74 = por %p72, %p73
      %p75 = scmp.ne.s32.totalorder %s63, %s64
      %p76 = scmp.eq.s32.totalorder %s19, 8
      %p77 = por %p75, %p76
      %p79 = scmp.ne.s32.totalorder %s64, %s78
      %p80 = scmp.eq.s32.totalorder %s19, 0
      %p81 = por %p79, %p80
      %s83 = sadd.s32 %s82, 1
      %p86 = scmp.eq.s32.totalorder %s13, 8
      %p87 = scmp.ne.s32.totalorder %s82, %s84
      %p88 = scmp.eq.s32.totalorder %s13, 0
      %p89 = por %p87, %p88
      %p90 = scmp.ne.s32.totalorder %s82, %s84
      %p91 = scmp.eq.s32.totalorder %s18, 8
      %p92 = por %p90, %p91
      %p93 = scmp.ne.s32.totalorder %s84, %s85
      %p94 = scmp.eq.s32.totalorder %s18, 0
      %p95 = por %p93, %p94
      %p96 = scmp.ne.s32.totalorder %s84, %s85
      %p97 = scmp.eq.s32.totalorder %s19, 8
      %p98 = por %p96, %p97
      %p100 = scmp.ne.s32.totalorder %s85, %s99
      %p101 = scmp.eq.s32.totalorder %s19, 0
      %p102 = por %p100, %p101
      %s104 = sadd.s32 %s103, 1
      %p107 = scmp.eq.s32.totalorder %s13, 8
      %p108 = scmp.ne.s32.totalorder %s103, %s105
      %p109 = scmp.eq.s32.totalorder %s13, 0
      %p110 = por %p108, %p109
      %p111 = scmp.ne.s32.totalorder %s103, %s105
      %p112 = scmp.eq.s32.totalorder %s18, 8
      %p113 = por %p111, %p112
      %p114 = scmp.ne.s32.totalorder %s105, %s106
      %p115 = scmp.eq.s32.totalorder %s18, 0
      %p116 = por %p114, %p115
      %p117 = scmp.ne.s32.totalorder %s105, %s106
      %p118 = scmp.eq.s32.totalorder %s19, 8
      %p119 = por %p117, %p118
      %p121 = scmp.ne.s32.totalorder %s106, %s120
      %p122 = scmp.eq.s32.totalorder %s19, 0
      %p123 = por %p121, %p122
      %s124 = ssub.s32 %s20, %s32
      %p125 = scmp.eq.s32.totalorder %s124, 0
      %s127 = sadd.s32 %s126, 1
      %s128 = scalar_select %p125, %s126, %s127
      %p131 = pneg %p125
      %p132 = scmp.eq.s32.totalorder %s13, 8
      %p133 = por %p131, %p132
      %p134 = scmp.ne.s32.totalorder %s126, %s129
      %p135 = scmp.eq.s32.totalorder %s13, 0
      %p136 = por %p134, %p135
      %p137 = scmp.ne.s32.totalorder %s126, %s129
      %p138 = scmp.eq.s32.totalorder %s18, 8
      %p139 = por %p137, %p138
      %p140 = scmp.ne.s32.totalorder %s129, %s130
      %p141 = scmp.eq.s32.totalorder %s18, 0
      %p142 = por %p140, %p141
      %p143 = scmp.ne.s32.totalorder %s129, %s130
      %p144 = scmp.eq.s32.totalorder %s19, 8
      %p145 = por %p143, %p144
      %p147 = scmp.ne.s32.totalorder %s130, %s146
      %p148 = scmp.eq.s32.totalorder %s19, 0
      %p149 = por %p147, %p148
      %p150 = scmp.le.s32.totalorder 1, %s13
      %p151 = scmp.lt.s32.totalorder %s13, 10
      %p152 = pnand %p150, %p151
      %p153 = pneg %p152
      // Predicated region
      $region9: #{resgcn_forward.2} parent=5 // pred_check
        _
      $region10: #{resgcn_forward.2} parent=5 // pred_check_branch
        %155 = sbr.rel (%p152) target = $region12
      $region11: #{resgcn_forward.2} parent=5 // pred_region
        %s156 = ssub.s32 %s13, 1
        // Predicated region
        $region13: #{resgcn_forward.2} parent=11 // pred_check
          %p157 = pneg %p74
        $region14: #{resgcn_forward.2} parent=11 // pred_check_branch
          %159 = sbr.rel (%p157) target = $region16
        $region15: #{resgcn_forward.2} parent=11 // pred_region
          _
        $region16: #{resgcn_forward.2} parent=11 // pred_fallthru
          _
        // Predicated region
        $region17: #{resgcn_forward.2} parent=11 // pred_check
          %p160 = pneg %p95
        $region18: #{resgcn_forward.2} parent=11 // pred_check_branch
          %162 = sbr.rel (%p160) target = $region20
        $region19: #{resgcn_forward.2} parent=11 // pred_region
          _
        $region20: #{resgcn_forward.2} parent=11 // pred_fallthru
          _
        // Predicated region
        $region21: #{resgcn_forward.2} parent=11 // pred_check
          %p163 = pneg %p116
        $region22: #{resgcn_forward.2} parent=11 // pred_check_branch
          %165 = sbr.rel (%p163) target = $region24
        $region23: #{resgcn_forward.2} parent=11 // pred_region
          _
        $region24: #{resgcn_forward.2} parent=11 // pred_fallthru
          _
      $region12: #{resgcn_forward.2} parent=5 // pred_fallthru
        _
      %p166 = scmp.lt.s32.totalorder %s13, 9
      // Predicated region
      $region25: #{resgcn_forward.2} parent=5 // pred_check
        %p167 = pneg %p166
      $region26: #{resgcn_forward.2} parent=5 // pred_check_branch
        %169 = sbr.rel (%p167) target = $region28
      $region27: #{resgcn_forward.2} parent=5 // pred_region
        // Predicated region
        $region29: #{resgcn_forward.2} parent=27 // pred_check
          %p170 = pneg %p47
        $region30: #{resgcn_forward.2} parent=27 // pred_check_branch
          %172 = sbr.rel (%p170) target = $region32
        $region31: #{resgcn_forward.2} parent=27 // pred_region
          %s173 = sand.u32 %s37, 1
          %s174 = scalar_lea.sflag [#allocation4], %s173
          %s175 = sand.u32 %s37, 1
          %s176 = smul.addr %s175, 256
          %s177 = scalar_lea.vmem [#allocation3], %s176
          %s178 = smul.u32 32, %s20
          %s179 = smul.u32 2, %s21
          %s181 = ssub.s32 4096, 4096
          %182 = vsyncadd %s174, %s181
          %s183 = smul.addr %s178, 6
          %s184 = sadd.s32 %s179, %s183
          %s185 = smul.addr %s184, 64
          %s186 = scalar_lea.hbm %s0, %s185
          %s187 = sshll.u32 %s177, 4
          %s188 = int_to_ptr.vmem [resolvable:$true] %s187
          %193 = dma.hbm_to_vmem [thread:$0]  %s186, 4096, %s188, %s174, 384, 128, 8
        $region32: #{resgcn_forward.2} parent=27 // pred_fallthru
          _
      $region28: #{resgcn_forward.2} parent=5 // pred_fallthru
        _
      %p194 = scmp.le.s32.totalorder 1, %s13
      %p195 = scmp.lt.s32.totalorder %s13, 10
      %p196 = pnand %p194, %p195
      %p197 = pneg %p196
      // Predicated region
      $region33: #{resgcn_forward.2} parent=5 // pred_check
        _
      $region34: #{resgcn_forward.2} parent=5 // pred_check_branch
        %199 = sbr.rel (%p196) target = $region36
      $region35: #{resgcn_forward.2} parent=5 // pred_region
        %s200 = ssub.s32 %s13, 1
        %s201 = sand.u32 %s40, 1
        %s202 = scalar_lea.sflag [#allocation4], %s201
        %s203 = sand.u32 %s40, 1
        %s204 = smul.addr %s203, 256
        %s205 = scalar_lea.vmem [#allocation3], %s204
        // Predicated region
        $region37: #{resgcn_forward.2} parent=35 // pred_check
          %p206 = pneg %p53
        $region38: #{resgcn_forward.2} parent=35 // pred_check_branch
          %208 = sbr.rel (%p206) target = $region40
        $region39: #{resgcn_forward.2} parent=35 // pred_region
          %209 = dma.done %s202, 4096
        $region40: #{resgcn_forward.2} parent=35 // pred_fallthru
          _
        %s210 = sand.u32 %s40, 1
        %s211 = scalar_lea.sflag [#allocation4], %s210
        %s212 = sand.u32 %s40, 1
        %s213 = smul.addr %s212, 256
        %s214 = scalar_lea.vmem [#allocation3], %s213
        %p215 = pneg %p53
        %p216 = pneg %p50
        %p217 = pneg %p74
        %p218 = pneg %p71
        %p219 = pneg %p95
        %p220 = pneg %p92
        %p221 = pneg %p116
        %p222 = pneg %p113
        %p223 = pneg %p142
        %p224 = pneg %p139
        %s225 = smul.u32 32, %s22
        %p226 = scmp.lt.s32.totalorder %s225, 95
        %s227 = scalar_select %p226, %s225, 95
        %s228 = smul.addr %s227, 4
        %s229 = scalar_lea.vmem %s4, %s228
        %s230 = smul.u32 32, %s22
        %s231 = smul.u32 2, %s23
        %s232 = smul.u32 32, %s22
        %p233 = scmp.lt.s32.totalorder %s232, 95
        %s234 = scalar_select %p233, %s232, 95
        %s235 = smul.addr %s234, 4
        %s236 = scalar_lea.vmem %s4, %s235
        %s237 = smul.u32 32, %s22
        %p239 = scmp.eq.s32.totalorder %s23, 0
        // Predicated region
        $region41: #{resgcn_forward.2} parent=35 // pred_check
          %p240 = pneg %p239
        $region42: #{resgcn_forward.2} parent=35 // pred_check_branch
          %242 = sbr.rel (%p240) target = $region44
        $region43: #{resgcn_forward.2} parent=35 // pred_region
          %243 = vst [vmem:[#allocation2] sm:$0xff] 0.0
          %244 = vst [vmem:[#allocation2 + $0x8] sm:$0xff] 0.0
          %245 = vst [vmem:[#allocation2 + $0x10] sm:$0xff] 0.0
          %246 = vst [vmem:[#allocation2 + $0x18] sm:$0xff] 0.0
          %247 = vst [vmem:[#allocation2 + $0x20] sm:$0xff] 0.0
          %248 = vst [vmem:[#allocation2 + $0x28] sm:$0xff] 0.0
          %249 = vst [vmem:[#allocation2 + $0x30] sm:$0xff] 0.0
          %250 = vst [vmem:[#allocation2 + $0x38] sm:$0xff] 0.0
          %251 = vst [vmem:[#allocation2 + $0x40] sm:$0xff] 0.0
          %252 = vst [vmem:[#allocation2 + $0x48] sm:$0xff] 0.0
          %253 = vst [vmem:[#allocation2 + $0x50] sm:$0xff] 0.0
          %254 = vst [vmem:[#allocation2 + $0x58] sm:$0xff] 0.0
          %255 = vst [vmem:[#allocation2 + $0x60] sm:$0xff] 0.0
          %256 = vst [vmem:[#allocation2 + $0x68] sm:$0xff] 0.0
          %257 = vst [vmem:[#allocation2 + $0x70] sm:$0xff] 0.0
          %258 = vst [vmem:[#allocation2 + $0x78] sm:$0xff] 0.0
          %259 = vst [vmem:[#allocation2 + $0x80] sm:$0xff] 0.0
          %260 = vst [vmem:[#allocation2 + $0x88] sm:$0xff] 0.0
          %261 = vst [vmem:[#allocation2 + $0x90] sm:$0xff] 0.0
          %262 = vst [vmem:[#allocation2 + $0x98] sm:$0xff] 0.0
          %263 = vst [vmem:[#allocation2 + $0xa0] sm:$0xff] 0.0
          %264 = vst [vmem:[#allocation2 + $0xa8] sm:$0xff] 0.0
          %265 = vst [vmem:[#allocation2 + $0xb0] sm:$0xff] 0.0
          %266 = vst [vmem:[#allocation2 + $0xb8] sm:$0xff] 0.0
          %267 = vst [vmem:[#allocation2 + $0xc0] sm:$0xff] 0.0
          %268 = vst [vmem:[#allocation2 + $0xc8] sm:$0xff] 0.0
          %269 = vst [vmem:[#allocation2 + $0xd0] sm:$0xff] 0.0
          %270 = vst [vmem:[#allocation2 + $0xd8] sm:$0xff] 0.0
          %271 = vst [vmem:[#allocation2 + $0xe0] sm:$0xff] 0.0
          %272 = vst [vmem:[#allocation2 + $0xe8] sm:$0xff] 0.0
          %273 = vst [vmem:[#allocation2 + $0xf0] sm:$0xff] 0.0
          %274 = vst [vmem:[#allocation2 + $0xf8] sm:$0xff] 0.0
        $region44: #{resgcn_forward.2} parent=35 // pred_fallthru
          _
        %s275 = smul.u32 %s23, 256
        %s276 = sshra.s32 %s275, 3
        %s277 = sand.u32 %s275, 7
        %s278 = smul.addr %s276, 4
        %s279 = scalar_lea.vmem %s1, %s278
        %v280 = vld [vmem:[%s279] sm:$0xf]
        %v281 = vld [vmem:[%s279 + $0x4] sm:$0xf]
        %v282 = vld [vmem:[%s279 + $0x8] sm:$0xf]
        %v283 = vld [vmem:[%s279 + $0xc] sm:$0xf]
        %v284 = vld [vmem:[%s279 + $0x10] sm:$0xf]
        %v285 = vld [vmem:[%s279 + $0x14] sm:$0xf]
        %v286 = vld [vmem:[%s279 + $0x18] sm:$0xf]
        %v287 = vld [vmem:[%s279 + $0x1c] sm:$0xf]
        %v288 = vld [vmem:[%s279 + $0x20] sm:$0xf]
        %v289 = vld [vmem:[%s279 + $0x24] sm:$0xf]
        %v290 = vld [vmem:[%s279 + $0x28] sm:$0xf]
        %v291 = vld [vmem:[%s279 + $0x2c] sm:$0xf]
        %v292 = vld [vmem:[%s279 + $0x30] sm:$0xf]
        %v293 = vld [vmem:[%s279 + $0x34] sm:$0xf]
        %v294 = vld [vmem:[%s279 + $0x38] sm:$0xf]
        %v295 = vld [vmem:[%s279 + $0x3c] sm:$0xf]
        %v296 = vld [vmem:[%s279 + $0x40] sm:$0xf]
        %v297 = vld [vmem:[%s279 + $0x44] sm:$0xf]
        %v298 = vld [vmem:[%s279 + $0x48] sm:$0xf]
        %v299 = vld [vmem:[%s279 + $0x4c] sm:$0xf]
        %v300 = vld [vmem:[%s279 + $0x50] sm:$0xf]
        %v301 = vld [vmem:[%s279 + $0x54] sm:$0xf]
        %v302 = vld [vmem:[%s279 + $0x58] sm:$0xf]
        %v303 = vld [vmem:[%s279 + $0x5c] sm:$0xf]
        %v304 = vld [vmem:[%s279 + $0x60] sm:$0xf]
        %v305 = vld [vmem:[%s279 + $0x64] sm:$0xf]
        %v306 = vld [vmem:[%s279 + $0x68] sm:$0xf]
        %v307 = vld [vmem:[%s279 + $0x6c] sm:$0xf]
        %v308 = vld [vmem:[%s279 + $0x70] sm:$0xf]
        %v309 = vld [vmem:[%s279 + $0x74] sm:$0xf]
        %v310 = vld [vmem:[%s279 + $0x78] sm:$0xf]
        %v311 = vld [vmem:[%s279 + $0x7c] sm:$0xf]
        %v312 = vld [vmem:[#allocation2] sm:$0xff]
        %v313 = vld [vmem:[#allocation2 + $0x8] sm:$0xff]
        %v314 = vld [vmem:[#allocation2 + $0x10] sm:$0xff]
        %v315 = vld [vmem:[#allocation2 + $0x18] sm:$0xff]
        %v316 = vld [vmem:[#allocation2 + $0x20] sm:$0xff]
        %v317 = vld [vmem:[#allocation2 + $0x28] sm:$0xff]
        %v318 = vld [vmem:[#allocation2 + $0x30] sm:$0xff]
        %v319 = vld [vmem:[#allocation2 + $0x38] sm:$0xff]
        %v320 = vld [vmem:[#allocation2 + $0x40] sm:$0xff]
        %v321 = vld [vmem:[#allocation2 + $0x48] sm:$0xff]
        %v322 = vld [vmem:[#allocation2 + $0x50] sm:$0xff]
        %v323 = vld [vmem:[#allocation2 + $0x58] sm:$0xff]
        %v324 = vld [vmem:[#allocation2 + $0x60] sm:$0xff]
        %v325 = vld [vmem:[#allocation2 + $0x68] sm:$0xff]
        %v326 = vld [vmem:[#allocation2 + $0x70] sm:$0xff]
        %v327 = vld [vmem:[#allocation2 + $0x78] sm:$0xff]
        %v328 = vld [vmem:[#allocation2 + $0x80] sm:$0xff]
        %v329 = vld [vmem:[#allocation2 + $0x88] sm:$0xff]
        %v330 = vld [vmem:[#allocation2 + $0x90] sm:$0xff]
        %v331 = vld [vmem:[#allocation2 + $0x98] sm:$0xff]
        %v332 = vld [vmem:[#allocation2 + $0xa0] sm:$0xff]
        %v333 = vld [vmem:[#allocation2 + $0xa8] sm:$0xff]
        %v334 = vld [vmem:[#allocation2 + $0xb0] sm:$0xff]
        %v335 = vld [vmem:[#allocation2 + $0xb8] sm:$0xff]
        %v336 = vld [vmem:[#allocation2 + $0xc0] sm:$0xff]
        %v337 = vld [vmem:[#allocation2 + $0xc8] sm:$0xff]
        %v338 = vld [vmem:[#allocation2 + $0xd0] sm:$0xff]
        %v339 = vld [vmem:[#allocation2 + $0xd8] sm:$0xff]
        %v340 = vld [vmem:[#allocation2 + $0xe0] sm:$0xff]
        %v341 = vld [vmem:[#allocation2 + $0xe8] sm:$0xff]
        %v342 = vld [vmem:[#allocation2 + $0xf0] sm:$0xff]
        %v343 = vld [vmem:[#allocation2 + $0xf8] sm:$0xff]
        %v344 = vld [vmem:[%s205] sm:$0xff]
        %v345 = vld [vmem:[%s205 + $0x8] sm:$0xff]
        %v346 = vld [vmem:[%s205 + $0x10] sm:$0xff]
        %v347 = vld [vmem:[%s205 + $0x18] sm:$0xff]
        %v348 = vld [vmem:[%s205 + $0x20] sm:$0xff]
        %v349 = vld [vmem:[%s205 + $0x28] sm:$0xff]
        %v350 = vld [vmem:[%s205 + $0x30] sm:$0xff]
        %v351 = vld [vmem:[%s205 + $0x38] sm:$0xff]
        %v352 = vld [vmem:[%s205 + $0x40] sm:$0xff]
        %v353 = vld [vmem:[%s205 + $0x48] sm:$0xff]
        %v354 = vld [vmem:[%s205 + $0x50] sm:$0xff]
        %v355 = vld [vmem:[%s205 + $0x58] sm:$0xff]
        %v356 = vld [vmem:[%s205 + $0x60] sm:$0xff]
        %v357 = vld [vmem:[%s205 + $0x68] sm:$0xff]
        %v358 = vld [vmem:[%s205 + $0x70] sm:$0xff]
        %v359 = vld [vmem:[%s205 + $0x78] sm:$0xff]
        %v360 = vld [vmem:[%s205 + $0x80] sm:$0xff]
        %v361 = vld [vmem:[%s205 + $0x88] sm:$0xff]
        %v362 = vld [vmem:[%s205 + $0x90] sm:$0xff]
        %v363 = vld [vmem:[%s205 + $0x98] sm:$0xff]
        %v364 = vld [vmem:[%s205 + $0xa0] sm:$0xff]
        %v365 = vld [vmem:[%s205 + $0xa8] sm:$0xff]
        %v366 = vld [vmem:[%s205 + $0xb0] sm:$0xff]
        %v367 = vld [vmem:[%s205 + $0xb8] sm:$0xff]
        %v368 = vld [vmem:[%s205 + $0xc0] sm:$0xff]
        %v369 = vld [vmem:[%s205 + $0xc8] sm:$0xff]
        %v370 = vld [vmem:[%s205 + $0xd0] sm:$0xff]
        %v371 = vld [vmem:[%s205 + $0xd8] sm:$0xff]
        %v372 = vld [vmem:[%s205 + $0xe0] sm:$0xff]
        %v373 = vld [vmem:[%s205 + $0xe8] sm:$0xff]
        %v374 = vld [vmem:[%s205 + $0xf0] sm:$0xff]
        %v375 = vld [vmem:[%s205 + $0xf8] sm:$0xff]
        %v408 = vunpack.c.l.b16 %v344
        %v409 = vunpack.c.h.b16 %v344
        %v410 = vunpack.c.l.b16 %v345
        %v411 = vunpack.c.h.b16 %v345
        %v412 = vunpack.c.l.b16 %v346
        %v413 = vunpack.c.h.b16 %v346
        %v414 = vunpack.c.l.b16 %v347
        %v415 = vunpack.c.h.b16 %v347
        %v416 = vunpack.c.l.b16 %v348
        %v417 = vunpack.c.h.b16 %v348
        %v418 = vunpack.c.l.b16 %v349
        %v419 = vunpack.c.h.b16 %v349
        %v420 = vunpack.c.l.b16 %v350
        %v421 = vunpack.c.h.b16 %v350
        %v422 = vunpack.c.l.b16 %v351
        %v423 = vunpack.c.h.b16 %v351
        %v424 = vunpack.c.l.b16 %v352
        %v425 = vunpack.c.h.b16 %v352
        %v426 = vunpack.c.l.b16 %v353
        %v427 = vunpack.c.h.b16 %v353
        %v428 = vunpack.c.l.b16 %v354
        %v429 = vunpack.c.h.b16 %v354
        %v430 = vunpack.c.l.b16 %v355
        %v431 = vunpack.c.h.b16 %v355
        %v432 = vunpack.c.l.b16 %v356
        %v433 = vunpack.c.h.b16 %v356
        %v434 = vunpack.c.l.b16 %v357
        %v435 = vunpack.c.h.b16 %v357
        %v436 = vunpack.c.l.b16 %v358
        %v437 = vunpack.c.h.b16 %v358
        %v438 = vunpack.c.l.b16 %v359
        %v439 = vunpack.c.h.b16 %v359
        %v440 = vunpack.c.l.b16 %v360
        %v441 = vunpack.c.h.b16 %v360
        %v442 = vunpack.c.l.b16 %v361
        %v443 = vunpack.c.h.b16 %v361
        %v444 = vunpack.c.l.b16 %v362
        %v445 = vunpack.c.h.b16 %v362
        %v446 = vunpack.c.l.b16 %v363
        %v447 = vunpack.c.h.b16 %v363
        %v448 = vunpack.c.l.b16 %v364
        %v449 = vunpack.c.h.b16 %v364
        %v450 = vunpack.c.l.b16 %v365
        %v451 = vunpack.c.h.b16 %v365
        %v452 = vunpack.c.l.b16 %v366
        %v453 = vunpack.c.h.b16 %v366
        %v454 = vunpack.c.l.b16 %v367
        %v455 = vunpack.c.h.b16 %v367
        %v456 = vunpack.c.l.b16 %v368
        %v457 = vunpack.c.h.b16 %v368
        %v458 = vunpack.c.l.b16 %v369
        %v459 = vunpack.c.h.b16 %v369
        %v460 = vunpack.c.l.b16 %v370
        %v461 = vunpack.c.h.b16 %v370
        %v462 = vunpack.c.l.b16 %v371
        %v463 = vunpack.c.h.b16 %v371
        %v464 = vunpack.c.l.b16 %v372
        %v465 = vunpack.c.h.b16 %v372
        %v466 = vunpack.c.l.b16 %v373
        %v467 = vunpack.c.h.b16 %v373
        %v468 = vunpack.c.l.b16 %v374
        %v469 = vunpack.c.h.b16 %v374
        %v470 = vunpack.c.l.b16 %v375
        %v471 = vunpack.c.h.b16 %v375
        %v472 = vpack.c.b16 %v410, %v408
        %v473 = vpack.c.b16 %v411, %v409
        %v474 = vpack.c.b16 %v414, %v412
        %v475 = vpack.c.b16 %v415, %v413
        %v476 = vpack.c.b16 %v418, %v416
        %v477 = vpack.c.b16 %v419, %v417
        %v478 = vpack.c.b16 %v422, %v420
        %v479 = vpack.c.b16 %v423, %v421
        %v480 = vpack.c.b16 %v426, %v424
        %v481 = vpack.c.b16 %v427, %v425
        %v482 = vpack.c.b16 %v430, %v428
        %v483 = vpack.c.b16 %v431, %v429
        %v484 = vpack.c.b16 %v434, %v432
        %v485 = vpack.c.b16 %v435, %v433
        %v486 = vpack.c.b16 %v438, %v436
        %v487 = vpack.c.b16 %v439, %v437
        %v488 = vpack.c.b16 %v442, %v440
        %v489 = vpack.c.b16 %v443, %v441
        %v490 = vpack.c.b16 %v446, %v444
        %v491 = vpack.c.b16 %v447, %v445
        %v492 = vpack.c.b16 %v450, %v448
        %v493 = vpack.c.b16 %v451, %v449
        %v494 = vpack.c.b16 %v454, %v452
        %v495 = vpack.c.b16 %v455, %v453
        %v496 = vpack.c.b16 %v458, %v456
        %v497 = vpack.c.b16 %v459, %v457
        %v498 = vpack.c.b16 %v462, %v460
        %v499 = vpack.c.b16 %v463, %v461
        %v500 = vpack.c.b16 %v466, %v464
        %v501 = vpack.c.b16 %v467, %v465
        %v502 = vpack.c.b16 %v470, %v468
        %v503 = vpack.c.b16 %v471, %v469
        %v568 = vunpack.c.l.b16 %v280
        %v569 = vunpack.c.l.b16 %v281
        %v570 = vunpack.c.l.b16 %v282
        %v571 = vunpack.c.l.b16 %v283
        %v572 = vunpack.c.l.b16 %v284
        %v573 = vunpack.c.l.b16 %v285
        %v574 = vunpack.c.l.b16 %v286
        %v575 = vunpack.c.l.b16 %v287
        %v576 = vunpack.c.l.b16 %v288
        %v577 = vunpack.c.l.b16 %v289
        %v578 = vunpack.c.l.b16 %v290
        %v579 = vunpack.c.l.b16 %v291
        %v580 = vunpack.c.l.b16 %v292
        %v581 = vunpack.c.l.b16 %v293
        %v582 = vunpack.c.l.b16 %v294
        %v583 = vunpack.c.l.b16 %v295
        %v584 = vunpack.c.l.b16 %v296
        %v585 = vunpack.c.l.b16 %v297
        %v586 = vunpack.c.l.b16 %v298
        %v587 = vunpack.c.l.b16 %v299
        %v588 = vunpack.c.l.b16 %v300
        %v589 = vunpack.c.l.b16 %v301
        %v590 = vunpack.c.l.b16 %v302
        %v591 = vunpack.c.l.b16 %v303
        %v592 = vunpack.c.l.b16 %v304
        %v593 = vunpack.c.l.b16 %v305
        %v594 = vunpack.c.l.b16 %v306
        %v595 = vunpack.c.l.b16 %v307
        %v596 = vunpack.c.l.b16 %v308
        %v597 = vunpack.c.l.b16 %v309
        %v598 = vunpack.c.l.b16 %v310
        %v599 = vunpack.c.l.b16 %v311
        %v600 = vpack.c.b16 %v569, %v568
        %v601 = vpack.c.b16 %v571, %v570
        %v602 = vpack.c.b16 %v573, %v572
        %v603 = vpack.c.b16 %v575, %v574
        %v604 = vpack.c.b16 %v577, %v576
        %v605 = vpack.c.b16 %v579, %v578
        %v606 = vpack.c.b16 %v581, %v580
        %v607 = vpack.c.b16 %v583, %v582
        %v608 = vpack.c.b16 %v585, %v584
        %v609 = vpack.c.b16 %v587, %v586
        %v610 = vpack.c.b16 %v589, %v588
        %v611 = vpack.c.b16 %v591, %v590
        %v612 = vpack.c.b16 %v593, %v592
        %v613 = vpack.c.b16 %v595, %v594
        %v614 = vpack.c.b16 %v597, %v596
        %v615 = vpack.c.b16 %v599, %v598
        %632 = vmatprep.subr.bf16.mxu0 0
        %633 = vmatpush1.bf16.msra.mxu0 %v600
        %634 = vmatprep.subr.bf16.mxu0 0
        %635 = vmatpush1.bf16.msra.mxu0 %v601
        %636 = vmatprep.subr.bf16.mxu0 0
        %637 = vmatpush1.bf16.msra.mxu0 %v602
        %638 = vmatprep.subr.bf16.mxu0 0
        %639 = vmatpush1.bf16.msra.mxu0 %v603
        %640 = vmatprep.subr.bf16.mxu0 0
        %641 = vmatpush1.bf16.msra.mxu0 %v604
        %642 = vmatprep.subr.bf16.mxu0 0
        %643 = vmatpush1.bf16.msra.mxu0 %v605
        %644 = vmatprep.subr.bf16.mxu0 0
        %645 = vmatpush1.bf16.msra.mxu0 %v606
        %646 = vmatprep.subr.bf16.mxu0 0
        %647 = vmatpush1.bf16.msra.mxu0 %v607
        %648 = vmatprep.subr.bf16.mxu0 0
        %649 = vmatpush1.bf16.msra.mxu0 %v608
        %650 = vmatprep.subr.bf16.mxu0 0
        %651 = vmatpush1.bf16.msra.mxu0 %v609
        %652 = vmatprep.subr.bf16.mxu0 0
        %653 = vmatpush1.bf16.msra.mxu0 %v610
        %654 = vmatprep.subr.bf16.mxu0 0
        %655 = vmatpush1.bf16.msra.mxu0 %v611
        %656 = vmatprep.subr.bf16.mxu0 0
        %657 = vmatpush1.bf16.msra.mxu0 %v612
        %658 = vmatprep.subr.bf16.mxu0 0
        %659 = vmatpush1.bf16.msra.mxu0 %v613
        %660 = vmatprep.subr.bf16.mxu0 0
        %661 = vmatpush1.bf16.msra.mxu0 %v614
        %662 = vmatprep.subr.bf16.mxu0 0
        %663 = vmatpush1.bf16.msra.mxu0 %v615
        %664 = vmatprep.mubr.bf16.mxu0 %v473
        %665 = vmatmul.mubr.bf16.gmra.mrb[0].mxu0 %v472
        %v666 = vpop.f32.mrb[0].mxu0
        %v667 = vadd.f32 0.0, %v666
        %v668 = vpop.f32.mrb[0].mxu0
        %v669 = vpop.f32.mrb[0].mxu0
        %v670 = vadd.f32 0.0, %v669
        %v671 = vpop.f32.mrb[0].mxu0
        %672 = vmatprep.mubr.bf16.mxu0 %v475
        %673 = vmatmul.mubr.bf16.gmra.mrb[0].mxu0 %v474
        %v674 = vpop.f32.mrb[0].mxu0
        %v675 = vadd.f32 0.0, %v674
        %v676 = vpop.f32.mrb[0].mxu0
        %v677 = vpop.f32.mrb[0].mxu0
        %v678 = vadd.f32 0.0, %v677
        %v679 = vpop.f32.mrb[0].mxu0
        %680 = vmatprep.mubr.bf16.mxu0 %v477
        %681 = vmatmul.mubr.bf16.gmra.mrb[0].mxu0 %v476
        %v682 = vpop.f32.mrb[0].mxu0
        %v683 = vadd.f32 0.0, %v682
        %v684 = vpop.f32.mrb[0].mxu0
        %v685 = vpop.f32.mrb[0].mxu0
        %v686 = vadd.f32 0.0, %v685
        %v687 = vpop.f32.mrb[0].mxu0
        %688 = vmatprep.mubr.bf16.mxu0 %v479
        %689 = vmatmul.mubr.bf16.gmra.mrb[0].mxu0 %v478
        %v690 = vpop.f32.mrb[0].mxu0
        %v691 = vadd.f32 0.0, %v690
        %v692 = vpop.f32.mrb[0].mxu0
        %v693 = vpop.f32.mrb[0].mxu0
        %v694 = vadd.f32 0.0, %v693
        %v695 = vpop.f32.mrb[0].mxu0
        %696 = vmatprep.mubr.bf16.mxu0 %v481
        %697 = vmatmul.mubr.bf16.gmra.mrb[0].mxu0 %v480
        %v698 = vpop.f32.mrb[0].mxu0
        %v699 = vadd.f32 0.0, %v698
        %v700 = vpop.f32.mrb[0].mxu0
        %v701 = vpop.f32.mrb[0].mxu0
        %v702 = vadd.f32 0.0, %v701
        %v703 = vpop.f32.mrb[0].mxu0
        %704 = vmatprep.mubr.bf16.mxu0 %v483
        %705 = vmatmul.mubr.bf16.gmra.mrb[0].mxu0 %v482
        %v706 = vpop.f32.mrb[0].mxu0
        %v707 = vadd.f32 0.0, %v706
        %v708 = vpop.f32.mrb[0].mxu0
        %v709 = vpop.f32.mrb[0].mxu0
        %v710 = vadd.f32 0.0, %v709
        %v711 = vpop.f32.mrb[0].mxu0
        %712 = vmatprep.mubr.bf16.mxu0 %v485
        %713 = vmatmul.mubr.bf16.gmra.mrb[0].mxu0 %v484
        %v714 = vpop.f32.mrb[0].mxu0
        %v715 = vadd.f32 0.0, %v714
        %v716 = vpop.f32.mrb[0].mxu0
        %v717 = vpop.f32.mrb[0].mxu0
        %v718 = vadd.f32 0.0, %v717
        %v719 = vpop.f32.mrb[0].mxu0
        %720 = vmatprep.mubr.bf16.mxu0 %v487
        %721 = vmatmul.mubr.bf16.gmra.mrb[0].mxu0 %v486
        %v722 = vpop.f32.mrb[0].mxu0
        %v723 = vadd.f32 0.0, %v722
        %v724 = vpop.f32.mrb[0].mxu0
        %v725 = vpop.f32.mrb[0].mxu0
        %v726 = vadd.f32 0.0, %v725
        %v727 = vpop.f32.mrb[0].mxu0
        %728 = vmatprep.mubr.bf16.mxu0 %v489
        %729 = vmatmul.mubr.bf16.gmra.mrb[0].mxu0 %v488
        %v730 = vpop.f32.mrb[0].mxu0
        %v731 = vadd.f32 0.0, %v730
        %v732 = vpop.f32.mrb[0].mxu0
        %v733 = vpop.f32.mrb[0].mxu0
        %v734 = vadd.f32 0.0, %v733
        %v735 = vpop.f32.mrb[0].mxu0
        %736 = vmatprep.mubr.bf16.mxu0 %v491
        %737 = vmatmul.mubr.bf16.gmra.mrb[0].mxu0 %v490
        %v738 = vpop.f32.mrb[0].mxu0
        %v739 = vadd.f32 0.0, %v738
        %v740 = vpop.f32.mrb[0].mxu0
        %v741 = vpop.f32.mrb[0].mxu0
        %v742 = vadd.f32 0.0, %v741
        %v743 = vpop.f32.mrb[0].mxu0
        %744 = vmatprep.mubr.bf16.mxu0 %v493
        %745 = vmatmul.mubr.bf16.gmra.mrb[0].mxu0 %v492
        %v746 = vpop.f32.mrb[0].mxu0
        %v747 = vadd.f32 0.0, %v746
        %v748 = vpop.f32.mrb[0].mxu0
        %v749 = vpop.f32.mrb[0].mxu0
        %v750 = vadd.f32 0.0, %v749
        %v751 = vpop.f32.mrb[0].mxu0
        %752 = vmatprep.mubr.bf16.mxu0 %v495
        %753 = vmatmul.mubr.bf16.gmra.mrb[0].mxu0 %v494
        %v754 = vpop.f32.mrb[0].mxu0
        %v755 = vadd.f32 0.0, %v754
        %v756 = vpop.f32.mrb[0].mxu0
        %v757 = vpop.f32.mrb[0].mxu0
        %v758 = vadd.f32 0.0, %v757
        %v759 = vpop.f32.mrb[0].mxu0
        %760 = vmatprep.mubr.bf16.mxu0 %v497
        %761 = vmatmul.mubr.bf16.gmra.mrb[0].mxu0 %v496
        %v762 = vpop.f32.mrb[0].mxu0
        %v763 = vadd.f32 0.0, %v762
        %v764 = vpop.f32.mrb[0].mxu0
        %v765 = vpop.f32.mrb[0].mxu0
        %v766 = vadd.f32 0.0, %v765
        %v767 = vpop.f32.mrb[0].mxu0
        %768 = vmatprep.mubr.bf16.mxu0 %v499
        %769 = vmatmul.mubr.bf16.gmra.mrb[0].mxu0 %v498
        %v770 = vpop.f32.mrb[0].mxu0
        %v771 = vadd.f32 0.0, %v770
        %v772 = vpop.f32.mrb[0].mxu0
        %v773 = vpop.f32.mrb[0].mxu0
        %v774 = vadd.f32 0.0, %v773
        %v775 = vpop.f32.mrb[0].mxu0
        %776 = vmatprep.mubr.bf16.mxu0 %v501
        %777 = vmatmul.mubr.bf16.gmra.mrb[0].mxu0 %v500
        %v778 = vpop.f32.mrb[0].mxu0
        %v779 = vadd.f32 0.0, %v778
        %v780 = vpop.f32.mrb[0].mxu0
        %v781 = vpop.f32.mrb[0].mxu0
        %v782 = vadd.f32 0.0, %v781
        %v783 = vpop.f32.mrb[0].mxu0
        %784 = vmatprep.mubr.bf16.mxu0 %v503
        %785 = vmatmul.mubr.bf16.gmra.mrb[0].mxu0 %v502
        %v786 = vpop.f32.mrb[0].mxu0
        %v787 = vadd.f32 0.0, %v786
        %v788 = vpop.f32.mrb[0].mxu0
        %v789 = vpop.f32.mrb[0].mxu0
        %v790 = vadd.f32 0.0, %v789
        %v791 = vpop.f32.mrb[0].mxu0
        %792 = vdwg.mxu0
        %v793 = vadd.f32 %v312, %v667
        %v794 = vadd.f32 %v313, %v670
        %v795 = vadd.f32 %v314, %v675
        %v796 = vadd.f32 %v315, %v678
        %v797 = vadd.f32 %v316, %v683
        %v798 = vadd.f32 %v317, %v686
        %v799 = vadd.f32 %v318, %v691
        %v800 = vadd.f32 %v319, %v694
        %v801 = vadd.f32 %v320, %v699
        %v802 = vadd.f32 %v321, %v702
        %v803 = vadd.f32 %v322, %v707
        %v804 = vadd.f32 %v323, %v710
        %v805 = vadd.f32 %v324, %v715
        %v806 = vadd.f32 %v325, %v718
        %v807 = vadd.f32 %v326, %v723
        %v808 = vadd.f32 %v327, %v726
        %v809 = vadd.f32 %v328, %v731
        %v810 = vadd.f32 %v329, %v734
        %v811 = vadd.f32 %v330, %v739
        %v812 = vadd.f32 %v331, %v742
        %v813 = vadd.f32 %v332, %v747
        %v814 = vadd.f32 %v333, %v750
        %v815 = vadd.f32 %v334, %v755
        %v816 = vadd.f32 %v335, %v758
        %v817 = vadd.f32 %v336, %v763
        %v818 = vadd.f32 %v337, %v766
        %v819 = vadd.f32 %v338, %v771
        %v820 = vadd.f32 %v339, %v774
        %v821 = vadd.f32 %v340, %v779
        %v822 = vadd.f32 %v341, %v782
        %v823 = vadd.f32 %v342, %v787
        %v824 = vadd.f32 %v343, %v790
        %825 = vst [vmem:[#allocation2] sm:$0xff] %v793
        %826 = vst [vmem:[#allocation2 + $0x8] sm:$0xff] %v794
        %827 = vst [vmem:[#allocation2 + $0x10] sm:$0xff] %v795
        %828 = vst [vmem:[#allocation2 + $0x18] sm:$0xff] %v796
        %829 = vst [vmem:[#allocation2 + $0x20] sm:$0xff] %v797
        %830 = vst [vmem:[#allocation2 + $0x28] sm:$0xff] %v798
        %831 = vst [vmem:[#allocation2 + $0x30] sm:$0xff] %v799
        %832 = vst [vmem:[#allocation2 + $0x38] sm:$0xff] %v800
        %833 = vst [vmem:[#allocation2 + $0x40] sm:$0xff] %v801
        %834 = vst [vmem:[#allocation2 + $0x48] sm:$0xff] %v802
        %835 = vst [vmem:[#allocation2 + $0x50] sm:$0xff] %v803
        %836 = vst [vmem:[#allocation2 + $0x58] sm:$0xff] %v804
        %837 = vst [vmem:[#allocation2 + $0x60] sm:$0xff] %v805
        %838 = vst [vmem:[#allocation2 + $0x68] sm:$0xff] %v806
        %839 = vst [vmem:[#allocation2 + $0x70] sm:$0xff] %v807
        %840 = vst [vmem:[#allocation2 + $0x78] sm:$0xff] %v808
        %841 = vst [vmem:[#allocation2 + $0x80] sm:$0xff] %v809
        %842 = vst [vmem:[#allocation2 + $0x88] sm:$0xff] %v810
        %843 = vst [vmem:[#allocation2 + $0x90] sm:$0xff] %v811
        %844 = vst [vmem:[#allocation2 + $0x98] sm:$0xff] %v812
        %845 = vst [vmem:[#allocation2 + $0xa0] sm:$0xff] %v813
        %846 = vst [vmem:[#allocation2 + $0xa8] sm:$0xff] %v814
        %847 = vst [vmem:[#allocation2 + $0xb0] sm:$0xff] %v815
        %848 = vst [vmem:[#allocation2 + $0xb8] sm:$0xff] %v816
        %849 = vst [vmem:[#allocation2 + $0xc0] sm:$0xff] %v817
        %850 = vst [vmem:[#allocation2 + $0xc8] sm:$0xff] %v818
        %851 = vst [vmem:[#allocation2 + $0xd0] sm:$0xff] %v819
        %852 = vst [vmem:[#allocation2 + $0xd8] sm:$0xff] %v820
        %853 = vst [vmem:[#allocation2 + $0xe0] sm:$0xff] %v821
        %854 = vst [vmem:[#allocation2 + $0xe8] sm:$0xff] %v822
        %855 = vst [vmem:[#allocation2 + $0xf0] sm:$0xff] %v823
        %856 = vst [vmem:[#allocation2 + $0xf8] sm:$0xff] %v824
        %p857 = scmp.eq.s32.totalorder %s23, 2
        // Predicated region
        $region45: #{resgcn_forward.2} parent=35 // pred_check
          %p858 = pneg %p857
        $region46: #{resgcn_forward.2} parent=35 // pred_check_branch
          %860 = sbr.rel (%p858) target = $region48
        $region47: #{resgcn_forward.2} parent=35 // pred_region
          %v861 = vld [vmem:[#allocation2] sm:$0xff]
          %v862 = vld [vmem:[#allocation2 + $0x8] sm:$0xff]
          %v863 = vld [vmem:[#allocation2 + $0x10] sm:$0xff]
          %v864 = vld [vmem:[#allocation2 + $0x18] sm:$0xff]
          %v865 = vld [vmem:[#allocation2 + $0x20] sm:$0xff]
          %v866 = vld [vmem:[#allocation2 + $0x28] sm:$0xff]
          %v867 = vld [vmem:[#allocation2 + $0x30] sm:$0xff]
          %v868 = vld [vmem:[#allocation2 + $0x38] sm:$0xff]
          %v869 = vld [vmem:[#allocation2 + $0x40] sm:$0xff]
          %v870 = vld [vmem:[#allocation2 + $0x48] sm:$0xff]
          %v871 = vld [vmem:[#allocation2 + $0x50] sm:$0xff]
          %v872 = vld [vmem:[#allocation2 + $0x58] sm:$0xff]
          %v873 = vld [vmem:[#allocation2 + $0x60] sm:$0xff]
          %v874 = vld [vmem:[#allocation2 + $0x68] sm:$0xff]
          %v875 = vld [vmem:[#allocation2 + $0x70] sm:$0xff]
          %v876 = vld [vmem:[#allocation2 + $0x78] sm:$0xff]
          %v877 = vld [vmem:[#allocation2 + $0x80] sm:$0xff]
          %v878 = vld [vmem:[#allocation2 + $0x88] sm:$0xff]
          %v879 = vld [vmem:[#allocation2 + $0x90] sm:$0xff]
          %v880 = vld [vmem:[#allocation2 + $0x98] sm:$0xff]
          %v881 = vld [vmem:[#allocation2 + $0xa0] sm:$0xff]
          %v882 = vld [vmem:[#allocation2 + $0xa8] sm:$0xff]
          %v883 = vld [vmem:[#allocation2 + $0xb0] sm:$0xff]
          %v884 = vld [vmem:[#allocation2 + $0xb8] sm:$0xff]
          %v885 = vld [vmem:[#allocation2 + $0xc0] sm:$0xff]
          %v886 = vld [vmem:[#allocation2 + $0xc8] sm:$0xff]
          %v887 = vld [vmem:[#allocation2 + $0xd0] sm:$0xff]
          %v888 = vld [vmem:[#allocation2 + $0xd8] sm:$0xff]
          %v889 = vld [vmem:[#allocation2 + $0xe0] sm:$0xff]
          %v890 = vld [vmem:[#allocation2 + $0xe8] sm:$0xff]
          %v891 = vld [vmem:[#allocation2 + $0xf0] sm:$0xff]
          %v892 = vld [vmem:[#allocation2 + $0xf8] sm:$0xff]
          %v893 = vpack.c.bf16 %v862, %v861
          %v894 = vpack.c.bf16 %v864, %v863
          %v895 = vpack.c.bf16 %v866, %v865
          %v896 = vpack.c.bf16 %v868, %v867
          %v897 = vpack.c.bf16 %v870, %v869
          %v898 = vpack.c.bf16 %v872, %v871
          %v899 = vpack.c.bf16 %v874, %v873
          %v900 = vpack.c.bf16 %v876, %v875
          %v901 = vpack.c.bf16 %v878, %v877
          %v902 = vpack.c.bf16 %v880, %v879
          %v903 = vpack.c.bf16 %v882, %v881
          %v904 = vpack.c.bf16 %v884, %v883
          %v905 = vpack.c.bf16 %v886, %v885
          %v906 = vpack.c.bf16 %v888, %v887
          %v907 = vpack.c.bf16 %v890, %v889
          %v908 = vpack.c.bf16 %v892, %v891
          %v909 = vld [vmem:[%s2] sm:$0xf]
          %v910 = vld [vmem:[%s2 + $0x4] sm:$0xf]
          %v911 = vld [vmem:[%s2 + $0x8] sm:$0xf]
          %v912 = vld [vmem:[%s2 + $0xc] sm:$0xf]
          %v913 = vld [vmem:[%s2 + $0x10] sm:$0xf]
          %v914 = vld [vmem:[%s2 + $0x14] sm:$0xf]
          %v915 = vld [vmem:[%s2 + $0x18] sm:$0xf]
          %v916 = vld [vmem:[%s2 + $0x1c] sm:$0xf]
          %v917 = vld [vmem:[%s2 + $0x20] sm:$0xf]
          %v918 = vld [vmem:[%s2 + $0x24] sm:$0xf]
          %v919 = vld [vmem:[%s2 + $0x28] sm:$0xf]
          %v920 = vld [vmem:[%s2 + $0x2c] sm:$0xf]
          %v921 = vld [vmem:[%s2 + $0x30] sm:$0xf]
          %v922 = vld [vmem:[%s2 + $0x34] sm:$0xf]
          %v923 = vld [vmem:[%s2 + $0x38] sm:$0xf]
          %v924 = vld [vmem:[%s2 + $0x3c] sm:$0xf]
          %v925 = vld [vmem:[%s3] sm:$0x1]
          %v927 = vlaneseq
          %v928 = vshrl.u32 %v927, 7
          %v929 = vsub.s32 0, %v928
          %v930 = vrot.slane %v925, %v929
          %v948 = vunpack.c.l.b16 %v909
          %v949 = vunpack.c.l.b16 %v910
          %v950 = vunpack.c.l.b16 %v911
          %v951 = vunpack.c.l.b16 %v912
          %v952 = vunpack.c.l.b16 %v913
          %v953 = vunpack.c.l.b16 %v914
          %v954 = vunpack.c.l.b16 %v915
          %v955 = vunpack.c.l.b16 %v916
          %v956 = vunpack.c.l.b16 %v917
          %v957 = vunpack.c.l.b16 %v918
          %v958 = vunpack.c.l.b16 %v919
          %v959 = vunpack.c.l.b16 %v920
          %v960 = vunpack.c.l.b16 %v921
          %v961 = vunpack.c.l.b16 %v922
          %v962 = vunpack.c.l.b16 %v923
          %v963 = vunpack.c.l.b16 %v924
          %v964 = vpack.c.b16 %v949, %v948
          %v965 = vpack.c.b16 %v951, %v950
          %v966 = vpack.c.b16 %v953, %v952
          %v967 = vpack.c.b16 %v955, %v954
          %v968 = vpack.c.b16 %v957, %v956
          %v969 = vpack.c.b16 %v959, %v958
          %v970 = vpack.c.b16 %v961, %v960
          %v971 = vpack.c.b16 %v963, %v962
          %980 = vmatprep.subr.bf16.mxu0 0
          %981 = vmatpush1.bf16.msra.mxu0 %v964
          %982 = vmatprep.subr.bf16.mxu0 0
          %983 = vmatpush1.bf16.msra.mxu0 %v965
          %984 = vmatprep.subr.bf16.mxu0 0
          %985 = vmatpush1.bf16.msra.mxu0 %v966
          %986 = vmatprep.subr.bf16.mxu0 0
          %987 = vmatpush1.bf16.msra.mxu0 %v967
          %988 = vmatprep.subr.bf16.mxu0 0
          %989 = vmatpush1.bf16.msra.mxu0 %v968
          %990 = vmatprep.subr.bf16.mxu0 0
          %991 = vmatpush1.bf16.msra.mxu0 %v969
          %992 = vmatprep.subr.bf16.mxu0 0
          %993 = vmatpush1.bf16.msra.mxu0 %v970
          %994 = vmatprep.subr.bf16.mxu0 0
          %995 = vmatpush1.bf16.msra.mxu0 %v971
          %996 = vmatprep.subr.bf16.mxu0 0
          %997 = vmatpush1.bf16.msra.mxu0 0
          %998 = vmatprep.subr.bf16.mxu0 0
          %999 = vmatpush1.bf16.msra.mxu0 0
          %1000 = vmatprep.subr.bf16.mxu0 0
          %1001 = vmatpush1.bf16.msra.mxu0 0
          %1002 = vmatprep.subr.bf16.mxu0 0
          %1003 = vmatpush1.bf16.msra.mxu0 0
          %1004 = vmatprep.subr.bf16.mxu0 0
          %1005 = vmatpush1.bf16.msra.mxu0 0
          %1006 = vmatprep.subr.bf16.mxu0 0
          %1007 = vmatpush1.bf16.msra.mxu0 0
          %1008 = vmatprep.subr.bf16.mxu0 0
          %1009 = vmatpush1.bf16.msra.mxu0 0
          %1010 = vmatprep.subr.bf16.mxu0 0
          %1011 = vmatpush1.bf16.msra.mxu0 0
          %1012 = vmatprep.mubr.bf16.mxu0 0
          %1013 = vmatmul.mubr.bf16.gmra.mrb[0].mxu0 %v893
          %v1014 = vpop.f32.mrb[0].mxu0
          %v1015 = vadd.f32 %v930, %v1014
          %v1016 = vpop.f32.mrb[0].mxu0
          %v1017 = vpop.f32.mrb[0].mxu0
          %v1018 = vadd.f32 %v930, %v1017
          %v1019 = vpop.f32.mrb[0].mxu0
          %1020 = vmatprep.mubr.bf16.mxu0 0
          %1021 = vmatmul.mubr.bf16.gmra.mrb[0].mxu0 %v894
          %v1022 = vpop.f32.mrb[0].mxu0
          %v1023 = vadd.f32 %v930, %v1022
          %v1024 = vpop.f32.mrb[0].mxu0
          %v1025 = vpop.f32.mrb[0].mxu0
          %v1026 = vadd.f32 %v930, %v1025
          %v1027 = vpop.f32.mrb[0].mxu0
          %1028 = vmatprep.mubr.bf16.mxu0 0
          %1029 = vmatmul.mubr.bf16.gmra.mrb[0].mxu0 %v895
          %v1030 = vpop.f32.mrb[0].mxu0
          %v1031 = vadd.f32 %v930, %v1030
          %v1032 = vpop.f32.mrb[0].mxu0
          %v1033 = vpop.f32.mrb[0].mxu0
          %v1034 = vadd.f32 %v930, %v1033
          %v1035 = vpop.f32.mrb[0].mxu0
          %1036 = vmatprep.mubr.bf16.mxu0 0
          %1037 = vmatmul.mubr.bf16.gmra.mrb[0].mxu0 %v896
          %v1038 = vpop.f32.mrb[0].mxu0
          %v1039 = vadd.f32 %v930, %v1038
          %v1040 = vpop.f32.mrb[0].mxu0
          %v1041 = vpop.f32.mrb[0].mxu0
          %v1042 = vadd.f32 %v930, %v1041
          %v1043 = vpop.f32.mrb[0].mxu0
          %1044 = vmatprep.mubr.bf16.mxu0 0
          %1045 = vmatmul.mubr.bf16.gmra.mrb[0].mxu0 %v897
          %v1046 = vpop.f32.mrb[0].mxu0
          %v1047 = vadd.f32 %v930, %v1046
          %v1048 = vpop.f32.mrb[0].mxu0
          %v1049 = vpop.f32.mrb[0].mxu0
          %v1050 = vadd.f32 %v930, %v1049
          %v1051 = vpop.f32.mrb[0].mxu0
          %1052 = vmatprep.mubr.bf16.mxu0 0
          %1053 = vmatmul.mubr.bf16.gmra.mrb[0].mxu0 %v898
          %v1054 = vpop.f32.mrb[0].mxu0
          %v1055 = vadd.f32 %v930, %v1054
          %v1056 = vpop.f32.mrb[0].mxu0
          %v1057 = vpop.f32.mrb[0].mxu0
          %v1058 = vadd.f32 %v930, %v1057
          %v1059 = vpop.f32.mrb[0].mxu0
          %1060 = vmatprep.mubr.bf16.mxu0 0
          %1061 = vmatmul.mubr.bf16.gmra.mrb[0].mxu0 %v899
          %v1062 = vpop.f32.mrb[0].mxu0
          %v1063 = vadd.f32 %v930, %v1062
          %v1064 = vpop.f32.mrb[0].mxu0
          %v1065 = vpop.f32.mrb[0].mxu0
          %v1066 = vadd.f32 %v930, %v1065
          %v1067 = vpop.f32.mrb[0].mxu0
          %1068 = vmatprep.mubr.bf16.mxu0 0
          %1069 = vmatmul.mubr.bf16.gmra.mrb[0].mxu0 %v900
          %v1070 = vpop.f32.mrb[0].mxu0
          %v1071 = vadd.f32 %v930, %v1070
          %v1072 = vpop.f32.mrb[0].mxu0
          %v1073 = vpop.f32.mrb[0].mxu0
          %v1074 = vadd.f32 %v930, %v1073
          %v1075 = vpop.f32.mrb[0].mxu0
          %1076 = vmatprep.mubr.bf16.mxu0 0
          %1077 = vmatmul.mubr.bf16.gmra.mrb[0].mxu0 %v901
          %v1078 = vpop.f32.mrb[0].mxu0
          %v1079 = vadd.f32 %v930, %v1078
          %v1080 = vpop.f32.mrb[0].mxu0
          %v1081 = vpop.f32.mrb[0].mxu0
          %v1082 = vadd.f32 %v930, %v1081
          %v1083 = vpop.f32.mrb[0].mxu0
          %1084 = vmatprep.mubr.bf16.mxu0 0
          %1085 = vmatmul.mubr.bf16.gmra.mrb[0].mxu0 %v902
          %v1086 = vpop.f32.mrb[0].mxu0
          %v1087 = vadd.f32 %v930, %v1086
          %v1088 = vpop.f32.mrb[0].mxu0
          %v1089 = vpop.f32.mrb[0].mxu0
          %v1090 = vadd.f32 %v930, %v1089
          %v1091 = vpop.f32.mrb[0].mxu0
          %1092 = vmatprep.mubr.bf16.mxu0 0
          %1093 = vmatmul.mubr.bf16.gmra.mrb[0].mxu0 %v903
          %v1094 = vpop.f32.mrb[0].mxu0
          %v1095 = vadd.f32 %v930, %v1094
          %v1096 = vpop.f32.mrb[0].mxu0
          %v1097 = vpop.f32.mrb[0].mxu0
          %v1098 = vadd.f32 %v930, %v1097
          %v1099 = vpop.f32.mrb[0].mxu0
          %1100 = vmatprep.mubr.bf16.mxu0 0
          %1101 = vmatmul.mubr.bf16.gmra.mrb[0].mxu0 %v904
          %v1102 = vpop.f32.mrb[0].mxu0
          %v1103 = vadd.f32 %v930, %v1102
          %v1104 = vpop.f32.mrb[0].mxu0
          %v1105 = vpop.f32.mrb[0].mxu0
          %v1106 = vadd.f32 %v930, %v1105
          %v1107 = vpop.f32.mrb[0].mxu0
          %1108 = vmatprep.mubr.bf16.mxu0 0
          %1109 = vmatmul.mubr.bf16.gmra.mrb[0].mxu0 %v905
          %v1110 = vpop.f32.mrb[0].mxu0
          %v1111 = vadd.f32 %v930, %v1110
          %v1112 = vpop.f32.mrb[0].mxu0
          %v1113 = vpop.f32.mrb[0].mxu0
          %v1114 = vadd.f32 %v930, %v1113
          %v1115 = vpop.f32.mrb[0].mxu0
          %1116 = vmatprep.mubr.bf16.mxu0 0
          %1117 = vmatmul.mubr.bf16.gmra.mrb[0].mxu0 %v906
          %v1118 = vpop.f32.mrb[0].mxu0
          %v1119 = vadd.f32 %v930, %v1118
          %v1120 = vpop.f32.mrb[0].mxu0
          %v1121 = vpop.f32.mrb[0].mxu0
          %v1122 = vadd.f32 %v930, %v1121
          %v1123 = vpop.f32.mrb[0].mxu0
          %1124 = vmatprep.mubr.bf16.mxu0 0
          %1125 = vmatmul.mubr.bf16.gmra.mrb[0].mxu0 %v907
          %v1126 = vpop.f32.mrb[0].mxu0
          %v1127 = vadd.f32 %v930, %v1126
          %v1128 = vpop.f32.mrb[0].mxu0
          %v1129 = vpop.f32.mrb[0].mxu0
          %v1130 = vadd.f32 %v930, %v1129
          %v1131 = vpop.f32.mrb[0].mxu0
          %1132 = vmatprep.mubr.bf16.mxu0 0
          %1133 = vmatmul.mubr.bf16.gmra.mrb[0].mxu0 %v908
          %v1134 = vpop.f32.mrb[0].mxu0
          %v1135 = vadd.f32 %v930, %v1134
          %v1136 = vpop.f32.mrb[0].mxu0
          %v1137 = vpop.f32.mrb[0].mxu0
          %v1138 = vadd.f32 %v930, %v1137
          %v1139 = vpop.f32.mrb[0].mxu0
          %1140 = vdwg.mxu0
          %v1141 = vmax.f32 %v1015, 0.0
          %v1142 = vmax.f32 %v1018, 0.0
          %v1143 = vmax.f32 %v1023, 0.0
          %v1144 = vmax.f32 %v1026, 0.0
          %v1145 = vmax.f32 %v1031, 0.0
          %v1146 = vmax.f32 %v1034, 0.0
          %v1147 = vmax.f32 %v1039, 0.0
          %v1148 = vmax.f32 %v1042, 0.0
          %v1149 = vmax.f32 %v1047, 0.0
          %v1150 = vmax.f32 %v1050, 0.0
          %v1151 = vmax.f32 %v1055, 0.0
          %v1152 = vmax.f32 %v1058, 0.0
          %v1153 = vmax.f32 %v1063, 0.0
          %v1154 = vmax.f32 %v1066, 0.0
          %v1155 = vmax.f32 %v1071, 0.0
          %v1156 = vmax.f32 %v1074, 0.0
          %v1157 = vmax.f32 %v1079, 0.0
          %v1158 = vmax.f32 %v1082, 0.0
          %v1159 = vmax.f32 %v1087, 0.0
          %v1160 = vmax.f32 %v1090, 0.0
          %v1161 = vmax.f32 %v1095, 0.0
          %v1162 = vmax.f32 %v1098, 0.0
          %v1163 = vmax.f32 %v1103, 0.0
          %v1164 = vmax.f32 %v1106, 0.0
          %v1165 = vmax.f32 %v1111, 0.0
          %v1166 = vmax.f32 %v1114, 0.0
          %v1167 = vmax.f32 %v1119, 0.0
          %v1168 = vmax.f32 %v1122, 0.0
          %v1169 = vmax.f32 %v1127, 0.0
          %v1170 = vmax.f32 %v1130, 0.0
          %v1171 = vmax.f32 %v1135, 0.0
          %v1172 = vmax.f32 %v1138, 0.0
          %v1173 = vpack.c.bf16 %v1142, %v1141
          %v1174 = vpack.c.bf16 %v1144, %v1143
          %v1175 = vpack.c.bf16 %v1146, %v1145
          %v1176 = vpack.c.bf16 %v1148, %v1147
          %v1177 = vpack.c.bf16 %v1150, %v1149
          %v1178 = vpack.c.bf16 %v1152, %v1151
          %v1179 = vpack.c.bf16 %v1154, %v1153
          %v1180 = vpack.c.bf16 %v1156, %v1155
          %v1181 = vpack.c.bf16 %v1158, %v1157
          %v1182 = vpack.c.bf16 %v1160, %v1159
          %v1183 = vpack.c.bf16 %v1162, %v1161
          %v1184 = vpack.c.bf16 %v1164, %v1163
          %v1185 = vpack.c.bf16 %v1166, %v1165
          %v1186 = vpack.c.bf16 %v1168, %v1167
          %v1187 = vpack.c.bf16 %v1170, %v1169
          %v1188 = vpack.c.bf16 %v1172, %v1171
          %v1205 = vunpack.c.l.b16 %v1173
          %v1206 = vunpack.c.h.b16 %v1173
          %v1207 = vunpack.c.l.b16 %v1174
          %v1208 = vunpack.c.h.b16 %v1174
          %v1209 = vunpack.c.l.b16 %v1175
          %v1210 = vunpack.c.h.b16 %v1175
          %v1211 = vunpack.c.l.b16 %v1176
          %v1212 = vunpack.c.h.b16 %v1176
          %v1213 = vunpack.c.l.b16 %v1177
          %v1214 = vunpack.c.h.b16 %v1177
          %v1215 = vunpack.c.l.b16 %v1178
          %v1216 = vunpack.c.h.b16 %v1178
          %v1217 = vunpack.c.l.b16 %v1179
          %v1218 = vunpack.c.h.b16 %v1179
          %v1219 = vunpack.c.l.b16 %v1180
          %v1220 = vunpack.c.h.b16 %v1180
          %v1221 = vunpack.c.l.b16 %v1181
          %v1222 = vunpack.c.h.b16 %v1181
          %v1223 = vunpack.c.l.b16 %v1182
          %v1224 = vunpack.c.h.b16 %v1182
          %v1225 = vunpack.c.l.b16 %v1183
          %v1226 = vunpack.c.h.b16 %v1183
          %v1227 = vunpack.c.l.b16 %v1184
          %v1228 = vunpack.c.h.b16 %v1184
          %v1229 = vunpack.c.l.b16 %v1185
          %v1230 = vunpack.c.h.b16 %v1185
          %v1231 = vunpack.c.l.b16 %v1186
          %v1232 = vunpack.c.h.b16 %v1186
          %v1233 = vunpack.c.l.b16 %v1187
          %v1234 = vunpack.c.h.b16 %v1187
          %v1235 = vunpack.c.l.b16 %v1188
          %v1236 = vunpack.c.h.b16 %v1188
          %v1237 = vpack.c.b16 %v1205, %v1205
          %v1238 = vpack.c.b16 %v1206, %v1206
          %v1239 = vpack.c.b16 %v1207, %v1207
          %v1240 = vpack.c.b16 %v1208, %v1208
          %v1241 = vpack.c.b16 %v1209, %v1209
          %v1242 = vpack.c.b16 %v1210, %v1210
          %v1243 = vpack.c.b16 %v1211, %v1211
          %v1244 = vpack.c.b16 %v1212, %v1212
          %v1245 = vpack.c.b16 %v1213, %v1213
          %v1246 = vpack.c.b16 %v1214, %v1214
          %v1247 = vpack.c.b16 %v1215, %v1215
          %v1248 = vpack.c.b16 %v1216, %v1216
          %v1249 = vpack.c.b16 %v1217, %v1217
          %v1250 = vpack.c.b16 %v1218, %v1218
          %v1251 = vpack.c.b16 %v1219, %v1219
          %v1252 = vpack.c.b16 %v1220, %v1220
          %v1253 = vpack.c.b16 %v1221, %v1221
          %v1254 = vpack.c.b16 %v1222, %v1222
          %v1255 = vpack.c.b16 %v1223, %v1223
          %v1256 = vpack.c.b16 %v1224, %v1224
          %v1257 = vpack.c.b16 %v1225, %v1225
          %v1258 = vpack.c.b16 %v1226, %v1226
          %v1259 = vpack.c.b16 %v1227, %v1227
          %v1260 = vpack.c.b16 %v1228, %v1228
          %v1261 = vpack.c.b16 %v1229, %v1229
          %v1262 = vpack.c.b16 %v1230, %v1230
          %v1263 = vpack.c.b16 %v1231, %v1231
          %v1264 = vpack.c.b16 %v1232, %v1232
          %v1265 = vpack.c.b16 %v1233, %v1233
          %v1266 = vpack.c.b16 %v1234, %v1234
          %v1267 = vpack.c.b16 %v1235, %v1235
          %v1268 = vpack.c.b16 %v1236, %v1236
          %1301 = vst [vmem:[%s236] sm:$0xf] %v1237
          %1302 = vst [vmem:[%s236 + $0x4] sm:$0xf] %v1238
          %1303 = vst [vmem:[%s236 + $0x8] sm:$0xf] %v1239
          %1304 = vst [vmem:[%s236 + $0xc] sm:$0xf] %v1240
          %1305 = vst [vmem:[%s236 + $0x10] sm:$0xf] %v1241
          %1306 = vst [vmem:[%s236 + $0x14] sm:$0xf] %v1242
          %1307 = vst [vmem:[%s236 + $0x18] sm:$0xf] %v1243
          %1308 = vst [vmem:[%s236 + $0x1c] sm:$0xf] %v1244
          %1309 = vst [vmem:[%s236 + $0x20] sm:$0xf] %v1245
          %1310 = vst [vmem:[%s236 + $0x24] sm:$0xf] %v1246
          %1311 = vst [vmem:[%s236 + $0x28] sm:$0xf] %v1247
          %1312 = vst [vmem:[%s236 + $0x2c] sm:$0xf] %v1248
          %1313 = vst [vmem:[%s236 + $0x30] sm:$0xf] %v1249
          %1314 = vst [vmem:[%s236 + $0x34] sm:$0xf] %v1250
          %1315 = vst [vmem:[%s236 + $0x38] sm:$0xf] %v1251
          %1316 = vst [vmem:[%s236 + $0x3c] sm:$0xf] %v1252
          %1317 = vst [vmem:[%s236 + $0x40] sm:$0xf] %v1253
          %1318 = vst [vmem:[%s236 + $0x44] sm:$0xf] %v1254
          %1319 = vst [vmem:[%s236 + $0x48] sm:$0xf] %v1255
          %1320 = vst [vmem:[%s236 + $0x4c] sm:$0xf] %v1256
          %1321 = vst [vmem:[%s236 + $0x50] sm:$0xf] %v1257
          %1322 = vst [vmem:[%s236 + $0x54] sm:$0xf] %v1258
          %1323 = vst [vmem:[%s236 + $0x58] sm:$0xf] %v1259
          %1324 = vst [vmem:[%s236 + $0x5c] sm:$0xf] %v1260
          %1325 = vst [vmem:[%s236 + $0x60] sm:$0xf] %v1261
          %1326 = vst [vmem:[%s236 + $0x64] sm:$0xf] %v1262
          %1327 = vst [vmem:[%s236 + $0x68] sm:$0xf] %v1263
          %1328 = vst [vmem:[%s236 + $0x6c] sm:$0xf] %v1264
          %1329 = vst [vmem:[%s236 + $0x70] sm:$0xf] %v1265
          %1330 = vst [vmem:[%s236 + $0x74] sm:$0xf] %v1266
          %1331 = vst [vmem:[%s236 + $0x78] sm:$0xf] %v1267
          %1332 = vst [vmem:[%s236 + $0x7c] sm:$0xf] %v1268
        $region48: #{resgcn_forward.2} parent=35 // pred_fallthru
          _
        %s1333 = smul.u32 32, %s22
        %p1334 = scmp.lt.s32.totalorder %s1333, 95
        %s1335 = scalar_select %p1334, %s1333, 95
        %s1336 = smul.addr %s1335, 4
        %s1337 = scalar_lea.vmem %s4, %s1336
        // Predicated region
        $region49: #{resgcn_forward.2} parent=35 // pred_check
          %p1338 = pneg %p139
        $region50: #{resgcn_forward.2} parent=35 // pred_check_branch
          %1340 = sbr.rel (%p1338) target = $region52
        $region51: #{resgcn_forward.2} parent=35 // pred_region
          %s1341 = smul.u32 32, %s22
        $region52: #{resgcn_forward.2} parent=35 // pred_fallthru
          _
      $region36: #{resgcn_forward.2} parent=5 // pred_fallthru
        _
      %p1342 = scmp.le.s32.totalorder 2, %s13
      // Predicated region
      $region53: #{resgcn_forward.2} parent=5 // pred_check
        %p1343 = pneg %p1342
      $region54: #{resgcn_forward.2} parent=5 // pred_check_branch
        %1345 = sbr.rel (%p1343) target = $region56
      $region55: #{resgcn_forward.2} parent=5 // pred_region
        %s1346 = ssub.s32 %s13, 2
        // Predicated region
        $region57: #{resgcn_forward.2} parent=55 // pred_check
          %p1347 = pneg %p145
        $region58: #{resgcn_forward.2} parent=55 // pred_check_branch
          %1349 = sbr.rel (%p1347) target = $region60
        $region59: #{resgcn_forward.2} parent=55 // pred_region
          %s1350 = smul.u32 32, %s24
          %p1351 = scmp.lt.s32.totalorder %s1350, 95
          %s1352 = scalar_select %p1351, %s1350, 95
          %s1353 = smul.addr %s1352, 4
          %s1354 = scalar_lea.vmem %s4, %s1353
        $region60: #{resgcn_forward.2} parent=55 // pred_fallthru
          _
      $region56: #{resgcn_forward.2} parent=5 // pred_fallthru
        _
    $region6: #{resgcn_forward.2} parent=1 // loop_footer
      %s17 = sadd.s32 1, %s13
    $region7: #{resgcn_forward.2} parent=1 // loop_footer_branch
      %12 = sbr.rel target = $region3
    $region8: #{resgcn_forward.2} parent=1 // loop_exit
      _
    %1355 = vsyncpa [#allocation4], 1
    %s1356 = scalar_lea.sflag [#allocation4], 1
    %1357 = vsyncpa %s1356, 1

</llo_original>
